<compile_context>
chip_gen: v5e
topology: v5e:2x2
jax: 0.10.0
libtpu: 0.0.40
codegen_flags: <defaults>
</compile_context>

<pallas_src>
import functools

import numpy as np
import jax
import jax.numpy as jnp
from jax.experimental import pallas as pl
from jax.experimental.pallas import tpu as pltpu

NEG = -1.0e30  # finite stand-in for -inf (zero_infinity handled explicitly)


def _round_up(x, m):
    return (x + m - 1) // m * m


# ----------------------------------------------------------------------------
# CTC forward (alpha recursion): Bt samples per grid step, class dim tiled.
# grid = (N_pad // Bt, C // tc); scratch lp_scr holds lp[b, t, s] for the block.
# ----------------------------------------------------------------------------
def _ctc_kernel(tmax_ref, enc_ref, ext_ref, olen_ref, tlen_ref, out_ref, lp_scr,
                *, cb_count, gather_dtype):
    nb = pl.program_id(0)
    cb = pl.program_id(1)
    Bt, T, tc = enc_ref.shape          # (8, T_pad, tc)
    Lp = ext_ref.shape[1]              # 2*S_max+1 padded to a multiple of 128

    ext = ext_ref[...]                 # (Bt, Lp) int32, blank-interleaved targets

    # ---- gather stage: lp[b, t, s] = enc[b, t, ext[b, s]] for this class tile ----
    # One-hot matmul per sample on the MXU (bf16 inputs, f32 accumulate).
    c_iota = jax.lax.broadcasted_iota(jnp.int32, (tc, Lp), 0) + cb * tc

    if cb_count > 1:
        @pl.when(cb == 0)
        def _():
            lp_scr[...] = jnp.zeros_like(lp_scr)

    for b in range(Bt):                                   # trace-time unroll
        ext_b = ext[b:b + 1, :]                           # (1, Lp)
        onehot = (c_iota == ext_b).astype(gather_dtype)   # (tc, Lp)
        enc_b = enc_ref[b].astype(gather_dtype)           # (T, tc)
        lp_b = jnp.dot(enc_b, onehot, preferred_element_type=jnp.float32)
        sl = pl.ds(b * T, T)                              # sample b owns rows [b*T, b*T+T)
        if cb_count == 1:
            lp_scr[sl, :] = lp_b
        else:
            lp_scr[sl, :] = lp_scr[sl, :] + lp_b

    # ---- alpha recursion (only once the full lp has been accumulated) ----
    def recursion():
        lane = jax.lax.broadcasted_iota(jnp.int32, (Bt, Lp), 1)
        # skip transition s-2 -> s allowed for non-blank s >= 2 with a different label
        ext_m2 = jnp.where(lane >= 2, pltpu.roll(ext, 2, axis=1), -1)
        skip = ((lane & 1) == 1) & (lane >= 2) & (ext != ext_m2)

        olen = olen_ref[...]                              # (Bt, 1) int32 input lengths
        tlen = tlen_ref[...]                              # (Bt, 1) int32 target lengths

        def lp_row(t):
            # rows {b*T + t} of the scratch -> (Bt, Lp)
            rows = [lp_scr[pl.ds(b * T + t, 1), :] for b in range(Bt)]
            return jnp.concatenate(rows, axis=0)

        alpha0 = jnp.where(lane < 2, lp_row(0), NEG)

        def body(t, alpha):
            a0 = alpha
            a1 = jnp.where(lane >= 1, pltpu.roll(alpha, 1, axis=1), NEG)
            a2 = jnp.where(skip, pltpu.roll(alpha, 2, axis=1), NEG)
            m = jnp.maximum(a0, jnp.maximum(a1, a2))
            lse = m + jnp.log(jnp.exp(a0 - m) + jnp.exp(a1 - m) + jnp.exp(a2 - m))
            new = lp_row(t) + lse
            # per-sample freeze once t passes this sample's input length
            return jnp.where(t < olen, new, alpha)

        t_max = tmax_ref[nb]                              # block max input length
        alpha = jax.lax.fori_loop(1, t_max, body, alpha0)

        # total log prob = logaddexp(alpha[2*S_i], alpha[2*S_i - 1])
        fin = (lane == 2 * tlen) | (lane == 2 * tlen - 1)
        vals = jnp.where(fin, alpha, NEG)
        m = jnp.max(vals, axis=1, keepdims=True)                       # (Bt, 1)
        lse = m + jnp.log(jnp.sum(jnp.exp(vals - m), axis=1, keepdims=True))
        loss = -lse
        loss = jnp.where(m < -1.0e29, jnp.zeros_like(loss), loss)      # zero_infinity
        denom = jnp.maximum(tlen, 1).astype(jnp.float32)
        out_ref[...] = loss / denom                                    # (Bt, 1)

    if cb_count == 1:
        recursion()
    else:
        pl.when(cb == cb_count - 1)(recursion)


# ----------------------------------------------------------------------------
# Cross-entropy (ignore_index) kernel: per-row losses, tiled over rows.
# ----------------------------------------------------------------------------
def _ce_kernel(x_ref, t_ref, loss_ref, *, ignore_index):
    x = x_ref[...]                                  # (tm, C) f32 logits / log-probs
    t = t_ref[...]                                  # (tm, 1) int32 targets
    onehot = jax.lax.broadcasted_iota(jnp.int32, x.shape, 1) == t
    picked = jnp.sum(jnp.where(onehot, x, 0.0), axis=1, keepdims=True)   # x[i, t_i]
    m = jnp.max(x, axis=1, keepdims=True)
    lse = m + jnp.log(jnp.sum(jnp.exp(x - m), axis=1, keepdims=True))
    valid = t != ignore_index
    loss_ref[...] = jnp.where(valid, lse - picked, 0.0)


# ----------------------------------------------------------------------------
# Wrapper = JointCTCCrossEntropyLoss.forward
# ----------------------------------------------------------------------------
def joint_ctc_ce_loss(encoder_log_probs, decoder_log_probs, output_lengths,
                      targets, target_lengths, *, blank_id, ignore_index,
                      ctc_weight=0.3, cross_entropy_weight=0.7,
                      batch_per_block=8, ce_row_tile=256, class_tile=512,
                      gather_dtype=jnp.bfloat16, encoder_batch_major=False):
    if encoder_batch_major:
        N, T, C = encoder_log_probs.shape
        enc = encoder_log_probs.astype(jnp.float32)
    else:
        T, N, C = encoder_log_probs.shape
        enc = jnp.transpose(encoder_log_probs, (1, 0, 2)).astype(jnp.float32)

    S = targets.shape[1]
    Bt = batch_per_block
    N_pad = _round_up(N, Bt)
    T_pad = _round_up(T, 8)
    Lp = _round_up(2 * S + 1, 128)

    # class tiling (engaged when C is an exact multiple of class_tile)
    if C > class_tile and C % class_tile == 0:
        tc, CB = class_tile, C // class_tile
    else:
        tc, CB = C, 1

    if (N_pad, T_pad) != (N, T):
        enc = jnp.zeros((N_pad, T_pad, C), jnp.float32).at[:N, :T, :].set(enc)

    tgt_i = targets.astype(jnp.int32)
    ext = jnp.full((N_pad, Lp), blank_id, jnp.int32)
    ext = ext.at[:N, 1:2 * S:2].set(tgt_i)

    olen = jnp.clip(output_lengths.astype(jnp.int32), 1, T)
    tlen = target_lengths.astype(jnp.int32)
    olen_col = jnp.ones((N_pad, 1), jnp.int32).at[:N, 0].set(olen)
    tlen_col = jnp.zeros((N_pad, 1), jnp.int32).at[:N, 0].set(tlen)
    tmax = jnp.max(olen_col.reshape(N_pad // Bt, Bt), axis=1)   # per-block loop bound

    # VMEM budget: double-buffered enc block + lp scratch (+ slack).
    # NOTE: v7x has 64 MiB VMEM/TC -- shrink class_tile / batch_per_block if this trips.
    vmem_est = (2 * Bt * T_pad * tc * 4 + Bt * T_pad * Lp * 4
                + 4 * Bt * Lp * 4 + (2 << 20))
    vmem_limit = int(min(max(vmem_est, 32 * 1024 * 1024), 96 * 1024 * 1024))

    per_sample = pl.pallas_call(
        functools.partial(_ctc_kernel, cb_count=CB, gather_dtype=gather_dtype),
        out_shape=jax.ShapeDtypeStruct((N_pad, 1), jnp.float32),
        grid_spec=pltpu.PrefetchScalarGridSpec(
            num_scalar_prefetch=1,
            grid=(N_pad // Bt, CB),
            in_specs=[
                pl.BlockSpec((Bt, T_pad, tc), lambda nb, cb, tmax: (nb, 0, cb)),
                pl.BlockSpec((Bt, Lp), lambda nb, cb, tmax: (nb, 0)),
                pl.BlockSpec((Bt, 1), lambda nb, cb, tmax: (nb, 0)),
                pl.BlockSpec((Bt, 1), lambda nb, cb, tmax: (nb, 0)),
            ],
            out_specs=pl.BlockSpec((Bt, 1), lambda nb, cb, tmax: (nb, 0)),
            scratch_shapes=[pltpu.VMEM((Bt * T_pad, Lp), jnp.float32)],
        ),
        compiler_params=pltpu.CompilerParams(
            dimension_semantics=("parallel", "arbitrary"),
            vmem_limit_bytes=vmem_limit),
    )(tmax, enc, ext, olen_col, tlen_col)

    ctc_mean = jnp.mean(per_sample[:N, 0])          # reduction='mean'

    # ---- Cross entropy on targets[:, 1:] ----
    tgt_flat = tgt_i[:, 1:].reshape(-1)
    M = tgt_flat.shape[0]
    tm = ce_row_tile
    Mp = _round_up(M, tm)
    x = jnp.zeros((Mp, C), jnp.float32).at[:M].set(
        decoder_log_probs.astype(jnp.float32))
    tcol = jnp.full((Mp, 1), ignore_index, jnp.int32).at[:M, 0].set(tgt_flat)

    rows = pl.pallas_call(
        functools.partial(_ce_kernel, ignore_index=ignore_index),
        out_shape=jax.ShapeDtypeStruct((Mp, 1), jnp.float32),
        grid=(Mp // tm,),
        in_specs=[pl.BlockSpec((tm, C), lambda i: (i, 0)),
                  pl.BlockSpec((tm, 1), lambda i: (i, 0))],
        out_specs=pl.BlockSpec((tm, 1), lambda i: (i, 0)),
        compiler_params=pltpu.CompilerParams(dimension_semantics=("parallel",)),
    )(x, tcol)

    valid_cnt = jnp.sum((tgt_flat != ignore_index).astype(jnp.float32))
    ce_mean = jnp.sum(rows[:M, 0]) / jnp.maximum(valid_cnt, 1.0)

    loss = ce_mean * cross_entropy_weight + ctc_mean * ctc_weight
    return loss, ctc_mean, ce_mean


# ----------------------------------------------------------------------------
# Pure numpy references (PyTorch semantics) for a sanity check.
# ----------------------------------------------------------------------------
def _ref_ctc(log_probs, targets, in_lens, tgt_lens, blank):
    log_probs = np.asarray(log_probs, dtype=np.float64)
    T, N, C = log_probs.shape
    per = []
    for n in range(N):
        Ti, S = int(in_lens[n]), int(tgt_lens[n])
        ext = [blank]
        for k in range(S):
            ext += [int(targets[n, k]), blank]
        L = len(ext)
        alpha = np.full(L, -np.inf)
        alpha[0] = log_probs[0, n, ext[0]]
        if L > 1:
            alpha[1] = log_probs[0, n, ext[1]]
        for t in range(1, Ti):
            new = np.full(L, -np.inf)
            for s in range(L):
                v = alpha[s]
                if s >= 1:
                    v = np.logaddexp(v, alpha[s - 1])
                if s >= 2 and ext[s] != blank and ext[s] != ext[s - 2]:
                    v = np.logaddexp(v, alpha[s - 2])
                new[s] = v + log_probs[t, n, ext[s]]
            alpha = new
        tot = np.logaddexp(alpha[L - 1], alpha[L - 2]) if L >= 2 else alpha[L - 1]
        loss = -tot
        if not np.isfinite(loss):
            loss = 0.0          # zero_infinity
        per.append(loss / max(S, 1))
    return float(np.mean(per))


def _ref_ce(x, t, ignore):
    x = np.asarray(x, dtype=np.float64)
    t = np.asarray(t)
    m = x.max(-1, keepdims=True)
    lse = np.log(np.sum(np.exp(x - m), -1)) + m[:, 0]
    picked = x[np.arange(x.shape[0]), t]
    valid = t != ignore
    return float(np.sum(np.where(valid, lse - picked, 0.0)) / max(valid.sum(), 1))


if __name__ == "__main__":
    key = jax.random.PRNGKey(0)
    T, N, C, S = 16, 2, 32, 8          # frames, batch, num_classes, max target len
    blank_id, ignore_index = C - 1, 0
    ctc_w, ce_w = 0.3, 0.7

    k1, k2 = jax.random.split(key)
    enc_lp = jax.nn.log_softmax(jax.random.normal(k1, (T, N, C), jnp.float32), -1)
    dec_lp = jax.nn.log_softmax(
        jax.random.normal(k2, (N * (S - 1), C), jnp.float32), -1)

    targets = jnp.array([[1, 5, 9, 3, 7, 2, 4, 6],
                         [1, 8, 8, 2, 3, 0, 0, 0]], jnp.int32)
    output_lengths = jnp.array([16, 12], jnp.int32)
    target_lengths = jnp.array([8, 5], jnp.int32)

    fn = jax.jit(functools.partial(
        joint_ctc_ce_loss, blank_id=blank_id, ignore_index=ignore_index,
        ctc_weight=ctc_w, cross_entropy_weight=ce_w))
    loss, ctc, ce = fn(enc_lp, dec_lp, output_lengths, targets, target_lengths)
    jax.block_until_ready(loss)

    ref_ctc_v = _ref_ctc(np.array(enc_lp), np.array(targets),
                         np.array(output_lengths), np.array(target_lengths),
                         blank_id)
    ref_ce_v = _ref_ce(np.array(dec_lp),
                       np.array(targets[:, 1:]).reshape(-1), ignore_index)
    ref_loss = ce_w * ref_ce_v + ctc_w * ref_ctc_v

    # CTC tolerance is slightly looser because the one-hot gather matmul runs in bf16.
    assert np.allclose(float(ctc), ref_ctc_v, rtol=1e-2, atol=5e-2), (float(ctc), ref_ctc_v)
    assert np.allclose(float(ce), ref_ce_v, rtol=1e-3, atol=1e-2), (float(ce), ref_ce_v)
    assert np.allclose(float(loss), ref_loss, rtol=1e-2, atol=5e-2), (float(loss), ref_loss)

    print("KERNEL_OK")
</pallas_src>

<mosaic_0001>
module attributes {stable_mosaic.version = 11 : i64} {
  func.func @_ce_kernel(%arg0: i32, %arg1: memref<256x32xf32, #tpu.memory_space<vmem>>, %arg2: memref<256x1xi32, #tpu.memory_space<vmem>>, %arg3: memref<256x1xf32, #tpu.memory_space<vmem>>) attributes {dimension_semantics = [#tpu.dimension_semantics<parallel>], iteration_bounds = array<i64: 1>, scalar_prefetch = 0 : i64, scratch_operands = 0 : i64, tpu.core_type = #tpu.core_type<tc>, window_params = [{transform_indices = @transform_0, window_bounds = array<i64: 256, 32>}, {transform_indices = @transform_1, window_bounds = array<i64: 256, 1>}, {transform_indices = @transform_2, window_bounds = array<i64: 256, 1>}]} {
    %c0 = arith.constant 0 : index
    %c0_0 = arith.constant 0 : index
    %0 = vector.load %arg1[%c0, %c0_0] : memref<256x32xf32, #tpu.memory_space<vmem>>, vector<256x32xf32>
    %c0_1 = arith.constant 0 : index
    %c0_2 = arith.constant 0 : index
    %1 = vector.load %arg2[%c0_1, %c0_2] : memref<256x1xi32, #tpu.memory_space<vmem>>, vector<256x1xi32>
    %2 = tpu.iota {dimensions = array<i32: 1>} : vector<256x32xi32>
    %3 = vector.broadcast %1 : vector<256x1xi32> to vector<256x32xi32>
    %4 = arith.cmpi eq, %2, %3 : vector<256x32xi32>
    %cst = arith.constant 0.000000e+00 : f32
    %5 = vector.broadcast %cst : f32 to vector<256x32xf32>
    %6 = arith.select %4, %0, %5 : vector<256x32xi1>, vector<256x32xf32>
    %cst_3 = arith.constant dense<0.000000e+00> : vector<256xf32>
    %7 = vector.multi_reduction <add>, %6, %cst_3 [1] : vector<256x32xf32> to vector<256xf32>
    %8 = vector.shape_cast %7 : vector<256xf32> to vector<256x1xf32>
    %cst_4 = arith.constant dense<0xFF800000> : vector<256xf32>
    %9 = vector.multi_reduction <maximumf>, %0, %cst_4 [1] : vector<256x32xf32> to vector<256xf32>
    %10 = vector.shape_cast %9 : vector<256xf32> to vector<256x1xf32>
    %11 = vector.broadcast %10 : vector<256x1xf32> to vector<256x32xf32>
    %12 = arith.subf %0, %11 : vector<256x32xf32>
    %13 = math.exp %12 : vector<256x32xf32>
    %cst_5 = arith.constant dense<0.000000e+00> : vector<256xf32>
    %14 = vector.multi_reduction <add>, %13, %cst_5 [1] : vector<256x32xf32> to vector<256xf32>
    %15 = vector.shape_cast %14 : vector<256xf32> to vector<256x1xf32>
    %16 = math.log %15 : vector<256x1xf32>
    %17 = arith.addf %10, %16 : vector<256x1xf32>
    %c0_i32 = arith.constant 0 : i32
    %18 = vector.broadcast %c0_i32 : i32 to vector<256x1xi32>
    %19 = arith.cmpi ne, %1, %18 : vector<256x1xi32>
    %20 = arith.subf %17, %8 : vector<256x1xf32>
    %cst_6 = arith.constant 0.000000e+00 : f32
    %21 = vector.broadcast %cst_6 : f32 to vector<256x1xf32>
    %22 = arith.select %19, %20, %21 : vector<256x1xi1>, vector<256x1xf32>
    %c0_7 = arith.constant 0 : index
    %c0_8 = arith.constant 0 : index
    %23 = vector.load %arg3[%c0_7, %c0_8] : memref<256x1xf32, #tpu.memory_space<vmem>>, vector<256x1xf32>
    tpu.vector_store %arg3[%c0_7, %c0_8], %22 {strides = array<i32>} : memref<256x1xf32, #tpu.memory_space<vmem>>, vector<256x1xf32>,
    return
  }
  func.func @transform_0(%arg0: i32) -> (i32, i32) {
    %c0_i32 = arith.constant 0 : i32
    %c0_i32_0 = arith.constant 0 : i32
    return %arg0, %c0_i32 : i32, i32
  }
  func.func @transform_1(%arg0: i32) -> (i32, i32) {
    %c0_i32 = arith.constant 0 : i32
    %c0_i32_0 = arith.constant 0 : i32
    return %arg0, %c0_i32 : i32, i32
  }
  func.func @transform_2(%arg0: i32) -> (i32, i32) {
    %c0_i32 = arith.constant 0 : i32
    %c0_i32_0 = arith.constant 0 : i32
    return %arg0, %c0_i32 : i32, i32
  }
}

module attributes {stable_mosaic.version = 11 : i64} {
  func.func @_ctc_kernel(%arg0: i32, %arg1: i32, %arg2: memref<1xi32, #tpu.memory_space<smem>>, %arg3: memref<8x16x32xf32, #tpu.memory_space<vmem>>, %arg4: memref<8x128xi32, #tpu.memory_space<vmem>>, %arg5: memref<8x1xi32, #tpu.memory_space<vmem>>, %arg6: memref<8x1xi32, #tpu.memory_space<vmem>>, %arg7: memref<8x1xf32, #tpu.memory_space<vmem>>, %arg8: memref<128x128xf32, #tpu.memory_space<vmem>>) attributes {dimension_semantics = [#tpu.dimension_semantics<parallel>, #tpu.dimension_semantics<arbitrary>], iteration_bounds = array<i64: 1, 1>, scalar_prefetch = 1 : i64, scratch_operands = 1 : i64, tpu.core_type = #tpu.core_type<tc>, window_params = [{transform_indices = @transform_0, window_bounds = array<i64: 8, 16, 32>}, {transform_indices = @transform_1, window_bounds = array<i64: 8, 128>}, {transform_indices = @transform_2, window_bounds = array<i64: 8, 1>}, {transform_indices = @transform_3, window_bounds = array<i64: 8, 1>}, {transform_indices = @transform_4, window_bounds = array<i64: 8, 1>}]} {
    %c0 = arith.constant 0 : index
    %c0_0 = arith.constant 0 : index
    %0 = vector.load %arg4[%c0, %c0_0] : memref<8x128xi32, #tpu.memory_space<vmem>>, vector<8x128xi32>
    %1 = tpu.iota {dimensions = array<i32: 0>} : vector<32x128xi32>
    %c32_i32 = arith.constant 32 : i32
    %2 = arith.muli %arg1, %c32_i32 : i32
    %3 = vector.broadcast %2 : i32 to vector<32x128xi32>
    %4 = arith.addi %1, %3 : vector<32x128xi32>
    %5 = vector.extract_strided_slice %0 {offsets = [0, 0], sizes = [1, 128], strides = [1, 1]} : vector<8x128xi32> to vector<1x128xi32>
    %6 = vector.broadcast %5 : vector<1x128xi32> to vector<32x128xi32>
    %7 = arith.cmpi eq, %4, %6 : vector<32x128xi32>
    %8 = arith.extui %7 : vector<32x128xi1> to vector<32x128xi32>
    %9 = arith.sitofp %8 : vector<32x128xi32> to vector<32x128xf32>
    %10 = arith.truncf %9 : vector<32x128xf32> to vector<32x128xbf16>
    %c0_1 = arith.constant 0 : index
    %c0_2 = arith.constant 0 : index
    %c0_3 = arith.constant 0 : index
    %11 = vector.load %arg3[%c0_1, %c0_2, %c0_3] : memref<8x16x32xf32, #tpu.memory_space<vmem>>, vector<1x16x32xf32>
    %12 = vector.shape_cast %11 : vector<1x16x32xf32> to vector<16x32xf32>
    %13 = arith.truncf %12 : vector<16x32xf32> to vector<16x32xbf16>
    %cst = arith.constant dense<0.000000e+00> : vector<16x128xf32>
    %14 = tpu.matmul %13, %10, %cst {dimension_numbers = #tpu.dot_dimension_numbers<[1], [0], [0], [1], [0, 0, 1, 1], [], []>} : vector<16x32xbf16>, vector<32x128xbf16>, vector<16x128xf32> -> vector<16x128xf32>
    %c0_4 = arith.constant 0 : index
    %c0_5 = arith.constant 0 : index
    %15 = vector.load %arg8[%c0_4, %c0_5] : memref<128x128xf32, #tpu.memory_space<vmem>>, vector<16x128xf32>
    tpu.vector_store %arg8[%c0_4, %c0_5], %14 {strides = array<i32>} : memref<128x128xf32, #tpu.memory_space<vmem>>, vector<16x128xf32>,
    %16 = vector.extract_strided_slice %0 {offsets = [1, 0], sizes = [1, 128], strides = [1, 1]} : vector<8x128xi32> to vector<1x128xi32>
    %17 = vector.broadcast %16 : vector<1x128xi32> to vector<32x128xi32>
    %18 = arith.cmpi eq, %4, %17 : vector<32x128xi32>
    %19 = arith.extui %18 : vector<32x128xi1> to vector<32x128xi32>
    %20 = arith.sitofp %19 : vector<32x128xi32> to vector<32x128xf32>
    %21 = arith.truncf %20 : vector<32x128xf32> to vector<32x128xbf16>
    %c1 = arith.constant 1 : index
    %c0_6 = arith.constant 0 : index
    %c0_7 = arith.constant 0 : index
    %22 = vector.load %arg3[%c1, %c0_6, %c0_7] : memref<8x16x32xf32, #tpu.memory_space<vmem>>, vector<1x16x32xf32>
    %23 = vector.shape_cast %22 : vector<1x16x32xf32> to vector<16x32xf32>
    %24 = arith.truncf %23 : vector<16x32xf32> to vector<16x32xbf16>
    %cst_8 = arith.constant dense<0.000000e+00> : vector<16x128xf32>
    %25 = tpu.matmul %24, %21, %cst_8 {dimension_numbers = #tpu.dot_dimension_numbers<[1], [0], [0], [1], [0, 0, 1, 1], [], []>} : vector<16x32xbf16>, vector<32x128xbf16>, vector<16x128xf32> -> vector<16x128xf32>
    %c16 = arith.constant 16 : index
    %c0_9 = arith.constant 0 : index
    %26 = vector.load %arg8[%c16, %c0_9] : memref<128x128xf32, #tpu.memory_space<vmem>>, vector<16x128xf32>
    tpu.vector_store %arg8[%c16, %c0_9], %25 {strides = array<i32>} : memref<128x128xf32, #tpu.memory_space<vmem>>, vector<16x128xf32>,
    %27 = vector.extract_strided_slice %0 {offsets = [2, 0], sizes = [1, 128], strides = [1, 1]} : vector<8x128xi32> to vector<1x128xi32>
    %28 = vector.broadcast %27 : vector<1x128xi32> to vector<32x128xi32>
    %29 = arith.cmpi eq, %4, %28 : vector<32x128xi32>
    %30 = arith.extui %29 : vector<32x128xi1> to vector<32x128xi32>
    %31 = arith.sitofp %30 : vector<32x128xi32> to vector<32x128xf32>
    %32 = arith.truncf %31 : vector<32x128xf32> to vector<32x128xbf16>
    %c2 = arith.constant 2 : index
    %c0_10 = arith.constant 0 : index
    %c0_11 = arith.constant 0 : index
    %33 = vector.load %arg3[%c2, %c0_10, %c0_11] : memref<8x16x32xf32, #tpu.memory_space<vmem>>, vector<1x16x32xf32>
    %34 = vector.shape_cast %33 : vector<1x16x32xf32> to vector<16x32xf32>
    %35 = arith.truncf %34 : vector<16x32xf32> to vector<16x32xbf16>
    %cst_12 = arith.constant dense<0.000000e+00> : vector<16x128xf32>
    %36 = tpu.matmul %35, %32, %cst_12 {dimension_numbers = #tpu.dot_dimension_numbers<[1], [0], [0], [1], [0, 0, 1, 1], [], []>} : vector<16x32xbf16>, vector<32x128xbf16>, vector<16x128xf32> -> vector<16x128xf32>
    %c32 = arith.constant 32 : index
    %c0_13 = arith.constant 0 : index
    %37 = vector.load %arg8[%c32, %c0_13] : memref<128x128xf32, #tpu.memory_space<vmem>>, vector<16x128xf32>
    tpu.vector_store %arg8[%c32, %c0_13], %36 {strides = array<i32>} : memref<128x128xf32, #tpu.memory_space<vmem>>, vector<16x128xf32>,
    %38 = vector.extract_strided_slice %0 {offsets = [3, 0], sizes = [1, 128], strides = [1, 1]} : vector<8x128xi32> to vector<1x128xi32>
    %39 = vector.broadcast %38 : vector<1x128xi32> to vector<32x128xi32>
    %40 = arith.cmpi eq, %4, %39 : vector<32x128xi32>
    %41 = arith.extui %40 : vector<32x128xi1> to vector<32x128xi32>
    %42 = arith.sitofp %41 : vector<32x128xi32> to vector<32x128xf32>
    %43 = arith.truncf %42 : vector<32x128xf32> to vector<32x128xbf16>
    %c3 = arith.constant 3 : index
    %c0_14 = arith.constant 0 : index
    %c0_15 = arith.constant 0 : index
    %44 = vector.load %arg3[%c3, %c0_14, %c0_15] : memref<8x16x32xf32, #tpu.memory_space<vmem>>, vector<1x16x32xf32>
    %45 = vector.shape_cast %44 : vector<1x16x32xf32> to vector<16x32xf32>
    %46 = arith.truncf %45 : vector<16x32xf32> to vector<16x32xbf16>
    %cst_16 = arith.constant dense<0.000000e+00> : vector<16x128xf32>
    %47 = tpu.matmul %46, %43, %cst_16 {dimension_numbers = #tpu.dot_dimension_numbers<[1], [0], [0], [1], [0, 0, 1, 1], [], []>} : vector<16x32xbf16>, vector<32x128xbf16>, vector<16x128xf32> -> vector<16x128xf32>
    %c48 = arith.constant 48 : index
    %c0_17 = arith.constant 0 : index
    %48 = vector.load %arg8[%c48, %c0_17] : memref<128x128xf32, #tpu.memory_space<vmem>>, vector<16x128xf32>
    tpu.vector_store %arg8[%c48, %c0_17], %47 {strides = array<i32>} : memref<128x128xf32, #tpu.memory_space<vmem>>, vector<16x128xf32>,
    %49 = vector.extract_strided_slice %0 {offsets = [4, 0], sizes = [1, 128], strides = [1, 1]} : vector<8x128xi32> to vector<1x128xi32>
    %50 = vector.broadcast %49 : vector<1x128xi32> to vector<32x128xi32>
    %51 = arith.cmpi eq, %4, %50 : vector<32x128xi32>
    %52 = arith.extui %51 : vector<32x128xi1> to vector<32x128xi32>
    %53 = arith.sitofp %52 : vector<32x128xi32> to vector<32x128xf32>
    %54 = arith.truncf %53 : vector<32x128xf32> to vector<32x128xbf16>
    %c4 = arith.constant 4 : index
    %c0_18 = arith.constant 0 : index
    %c0_19 = arith.constant 0 : index
    %55 = vector.load %arg3[%c4, %c0_18, %c0_19] : memref<8x16x32xf32, #tpu.memory_space<vmem>>, vector<1x16x32xf32>
    %56 = vector.shape_cast %55 : vector<1x16x32xf32> to vector<16x32xf32>
    %57 = arith.truncf %56 : vector<16x32xf32> to vector<16x32xbf16>
    %cst_20 = arith.constant dense<0.000000e+00> : vector<16x128xf32>
    %58 = tpu.matmul %57, %54, %cst_20 {dimension_numbers = #tpu.dot_dimension_numbers<[1], [0], [0], [1], [0, 0, 1, 1], [], []>} : vector<16x32xbf16>, vector<32x128xbf16>, vector<16x128xf32> -> vector<16x128xf32>
    %c64 = arith.constant 64 : index
    %c0_21 = arith.constant 0 : index
    %59 = vector.load %arg8[%c64, %c0_21] : memref<128x128xf32, #tpu.memory_space<vmem>>, vector<16x128xf32>
    tpu.vector_store %arg8[%c64, %c0_21], %58 {strides = array<i32>} : memref<128x128xf32, #tpu.memory_space<vmem>>, vector<16x128xf32>,
    %60 = vector.extract_strided_slice %0 {offsets = [5, 0], sizes = [1, 128], strides = [1, 1]} : vector<8x128xi32> to vector<1x128xi32>
    %61 = vector.broadcast %60 : vector<1x128xi32> to vector<32x128xi32>
    %62 = arith.cmpi eq, %4, %61 : vector<32x128xi32>
    %63 = arith.extui %62 : vector<32x128xi1> to vector<32x128xi32>
    %64 = arith.sitofp %63 : vector<32x128xi32> to vector<32x128xf32>
    %65 = arith.truncf %64 : vector<32x128xf32> to vector<32x128xbf16>
    %c5 = arith.constant 5 : index
    %c0_22 = arith.constant 0 : index
    %c0_23 = arith.constant 0 : index
    %66 = vector.load %arg3[%c5, %c0_22, %c0_23] : memref<8x16x32xf32, #tpu.memory_space<vmem>>, vector<1x16x32xf32>
    %67 = vector.shape_cast %66 : vector<1x16x32xf32> to vector<16x32xf32>
    %68 = arith.truncf %67 : vector<16x32xf32> to vector<16x32xbf16>
    %cst_24 = arith.constant dense<0.000000e+00> : vector<16x128xf32>
    %69 = tpu.matmul %68, %65, %cst_24 {dimension_numbers = #tpu.dot_dimension_numbers<[1], [0], [0], [1], [0, 0, 1, 1], [], []>} : vector<16x32xbf16>, vector<32x128xbf16>, vector<16x128xf32> -> vector<16x128xf32>
    %c80 = arith.constant 80 : index
    %c0_25 = arith.constant 0 : index
    %70 = vector.load %arg8[%c80, %c0_25] : memref<128x128xf32, #tpu.memory_space<vmem>>, vector<16x128xf32>
    tpu.vector_store %arg8[%c80, %c0_25], %69 {strides = array<i32>} : memref<128x128xf32, #tpu.memory_space<vmem>>, vector<16x128xf32>,
    %71 = vector.extract_strided_slice %0 {offsets = [6, 0], sizes = [1, 128], strides = [1, 1]} : vector<8x128xi32> to vector<1x128xi32>
    %72 = vector.broadcast %71 : vector<1x128xi32> to vector<32x128xi32>
    %73 = arith.cmpi eq, %4, %72 : vector<32x128xi32>
    %74 = arith.extui %73 : vector<32x128xi1> to vector<32x128xi32>
    %75 = arith.sitofp %74 : vector<32x128xi32> to vector<32x128xf32>
    %76 = arith.truncf %75 : vector<32x128xf32> to vector<32x128xbf16>
    %c6 = arith.constant 6 : index
    %c0_26 = arith.constant 0 : index
    %c0_27 = arith.constant 0 : index
    %77 = vector.load %arg3[%c6, %c0_26, %c0_27] : memref<8x16x32xf32, #tpu.memory_space<vmem>>, vector<1x16x32xf32>
    %78 = vector.shape_cast %77 : vector<1x16x32xf32> to vector<16x32xf32>
    %79 = arith.truncf %78 : vector<16x32xf32> to vector<16x32xbf16>
    %cst_28 = arith.constant dense<0.000000e+00> : vector<16x128xf32>
    %80 = tpu.matmul %79, %76, %cst_28 {dimension_numbers = #tpu.dot_dimension_numbers<[1], [0], [0], [1], [0, 0, 1, 1], [], []>} : vector<16x32xbf16>, vector<32x128xbf16>, vector<16x128xf32> -> vector<16x128xf32>
    %c96 = arith.constant 96 : index
    %c0_29 = arith.constant 0 : index
    %81 = vector.load %arg8[%c96, %c0_29] : memref<128x128xf32, #tpu.memory_space<vmem>>, vector<16x128xf32>
    tpu.vector_store %arg8[%c96, %c0_29], %80 {strides = array<i32>} : memref<128x128xf32, #tpu.memory_space<vmem>>, vector<16x128xf32>,
    %82 = vector.extract_strided_slice %0 {offsets = [7, 0], sizes = [1, 128], strides = [1, 1]} : vector<8x128xi32> to vector<1x128xi32>
    %83 = vector.broadcast %82 : vector<1x128xi32> to vector<32x128xi32>
    %84 = arith.cmpi eq, %4, %83 : vector<32x128xi32>
    %85 = arith.extui %84 : vector<32x128xi1> to vector<32x128xi32>
    %86 = arith.sitofp %85 : vector<32x128xi32> to vector<32x128xf32>
    %87 = arith.truncf %86 : vector<32x128xf32> to vector<32x128xbf16>
    %c7 = arith.constant 7 : index
    %c0_30 = arith.constant 0 : index
    %c0_31 = arith.constant 0 : index
    %88 = vector.load %arg3[%c7, %c0_30, %c0_31] : memref<8x16x32xf32, #tpu.memory_space<vmem>>, vector<1x16x32xf32>
    %89 = vector.shape_cast %88 : vector<1x16x32xf32> to vector<16x32xf32>
    %90 = arith.truncf %89 : vector<16x32xf32> to vector<16x32xbf16>
    %cst_32 = arith.constant dense<0.000000e+00> : vector<16x128xf32>
    %91 = tpu.matmul %90, %87, %cst_32 {dimension_numbers = #tpu.dot_dimension_numbers<[1], [0], [0], [1], [0, 0, 1, 1], [], []>} : vector<16x32xbf16>, vector<32x128xbf16>, vector<16x128xf32> -> vector<16x128xf32>
    %c112 = arith.constant 112 : index
    %c0_33 = arith.constant 0 : index
    %92 = vector.load %arg8[%c112, %c0_33] : memref<128x128xf32, #tpu.memory_space<vmem>>, vector<16x128xf32>
    tpu.vector_store %arg8[%c112, %c0_33], %91 {strides = array<i32>} : memref<128x128xf32, #tpu.memory_space<vmem>>, vector<16x128xf32>,
    %93 = tpu.iota {dimensions = array<i32: 1>} : vector<8x128xi32>
    %c2_i32 = arith.constant 2 : i32
    %94 = vector.broadcast %c2_i32 : i32 to vector<8x128xi32>
    %95 = arith.cmpi sge, %93, %94 : vector<8x128xi32>
    %c2_i32_34 = arith.constant 2 : i32
    %96 = tpu.dynamic_rotate %0 by %c2_i32_34 dim 1 : vector<8x128xi32>, i32 -> vector<8x128xi32>
    %c-1_i32 = arith.constant -1 : i32
    %97 = vector.broadcast %c-1_i32 : i32 to vector<8x128xi32>
    %98 = arith.select %95, %96, %97 : vector<8x128xi1>, vector<8x128xi32>
    %c1_i32 = arith.constant 1 : i32
    %99 = vector.broadcast %c1_i32 : i32 to vector<8x128xi32>
    %100 = arith.andi %93, %99 : vector<8x128xi32>
    %c1_i32_35 = arith.constant 1 : i32
    %101 = vector.broadcast %c1_i32_35 : i32 to vector<8x128xi32>
    %102 = arith.cmpi eq, %100, %101 : vector<8x128xi32>
    %c2_i32_36 = arith.constant 2 : i32
    %103 = vector.broadcast %c2_i32_36 : i32 to vector<8x128xi32>
    %104 = arith.cmpi sge, %93, %103 : vector<8x128xi32>
    %105 = arith.andi %102, %104 : vector<8x128xi1>
    %106 = arith.cmpi ne, %0, %98 : vector<8x128xi32>
    %107 = arith.andi %105, %106 : vector<8x128xi1>
    %c0_37 = arith.constant 0 : index
    %c0_38 = arith.constant 0 : index
    %108 = vector.load %arg5[%c0_37, %c0_38] : memref<8x1xi32, #tpu.memory_space<vmem>>, vector<8x1xi32>
    %c0_39 = arith.constant 0 : index
    %c0_40 = arith.constant 0 : index
    %109 = vector.load %arg6[%c0_39, %c0_40] : memref<8x1xi32, #tpu.memory_space<vmem>>, vector<8x1xi32>
    %c2_i32_41 = arith.constant 2 : i32
    %110 = vector.broadcast %c2_i32_41 : i32 to vector<8x128xi32>
    %111 = arith.cmpi slt, %93, %110 : vector<8x128xi32>
    %c0_42 = arith.constant 0 : index
    %c0_43 = arith.constant 0 : index
    %112 = vector.load %arg8[%c0_42, %c0_43] : memref<128x128xf32, #tpu.memory_space<vmem>>, vector<1x128xf32>
    %c16_44 = arith.constant 16 : index
    %c0_45 = arith.constant 0 : index
    %113 = vector.load %arg8[%c16_44, %c0_45] : memref<128x128xf32, #tpu.memory_space<vmem>>, vector<1x128xf32>
    %c32_46 = arith.constant 32 : index
    %c0_47 = arith.constant 0 : index
    %114 = vector.load %arg8[%c32_46, %c0_47] : memref<128x128xf32, #tpu.memory_space<vmem>>, vector<1x128xf32>
    %c48_48 = arith.constant 48 : index
    %c0_49 = arith.constant 0 : index
    %115 = vector.load %arg8[%c48_48, %c0_49] : memref<128x128xf32, #tpu.memory_space<vmem>>, vector<1x128xf32>
    %c64_50 = arith.constant 64 : index
    %c0_51 = arith.constant 0 : index
    %116 = vector.load %arg8[%c64_50, %c0_51] : memref<128x128xf32, #tpu.memory_space<vmem>>, vector<1x128xf32>
    %c80_52 = arith.constant 80 : index
    %c0_53 = arith.constant 0 : index
    %117 = vector.load %arg8[%c80_52, %c0_53] : memref<128x128xf32, #tpu.memory_space<vmem>>, vector<1x128xf32>
    %c96_54 = arith.constant 96 : index
    %c0_55 = arith.constant 0 : index
    %118 = vector.load %arg8[%c96_54, %c0_55] : memref<128x128xf32, #tpu.memory_space<vmem>>, vector<1x128xf32>
    %c112_56 = arith.constant 112 : index
    %c0_57 = arith.constant 0 : index
    %119 = vector.load %arg8[%c112_56, %c0_57] : memref<128x128xf32, #tpu.memory_space<vmem>>, vector<1x128xf32>
    %120 = tpu.concatenate %112, %113, %114, %115, %116, %117, %118, %119 in 0 : vector<1x128xf32>, vector<1x128xf32>, vector<1x128xf32>, vector<1x128xf32>, vector<1x128xf32>, vector<1x128xf32>, vector<1x128xf32>, vector<1x128xf32> -> vector<8x128xf32>
    %cst_58 = arith.constant -1.000000e+30 : f32
    %121 = vector.broadcast %cst_58 : f32 to vector<8x128xf32>
    %122 = arith.select %111, %120, %121 : vector<8x128xi1>, vector<8x128xf32>
    %123 = arith.index_cast %arg0 : i32 to index
    %124 = memref.load %arg2[%123] : memref<1xi32, #tpu.memory_space<smem>>
    %c1_i32_59 = arith.constant 1 : i32
    %125 = arith.subi %124, %c1_i32_59 : i32
    %126 = arith.addi %c1_i32_59, %125 : i32
    %c1_i32_60 = arith.constant 1 : i32
    %127 = scf.for %arg9 = %c1_i32_59 to %126 step %c1_i32_60 iter_args(%arg10 = %122) -> (vector<8x128xf32>)  : i32 {
      %c1_i32_73 = arith.constant 1 : i32
      %161 = vector.broadcast %c1_i32_73 : i32 to vector<8x128xi32>
      %162 = arith.cmpi sge, %93, %161 : vector<8x128xi32>
      %c1_i32_74 = arith.constant 1 : i32
      %163 = tpu.dynamic_rotate %arg10 by %c1_i32_74 dim 1 : vector<8x128xf32>, i32 -> vector<8x128xf32>
      %cst_75 = arith.constant -1.000000e+30 : f32
      %164 = vector.broadcast %cst_75 : f32 to vector<8x128xf32>
      %165 = arith.select %162, %163, %164 : vector<8x128xi1>, vector<8x128xf32>
      %c2_i32_76 = arith.constant 2 : i32
      %166 = tpu.dynamic_rotate %arg10 by %c2_i32_76 dim 1 : vector<8x128xf32>, i32 -> vector<8x128xf32>
      %cst_77 = arith.constant -1.000000e+30 : f32
      %167 = vector.broadcast %cst_77 : f32 to vector<8x128xf32>
      %168 = arith.select %107, %166, %167 : vector<8x128xi1>, vector<8x128xf32>
      %169 = arith.maximumf %165, %168 : vector<8x128xf32>
      %170 = arith.maximumf %arg10, %169 : vector<8x128xf32>
      %171 = arith.subf %arg10, %170 : vector<8x128xf32>
      %172 = math.exp %171 : vector<8x128xf32>
      %173 = arith.subf %165, %170 : vector<8x128xf32>
      %174 = math.exp %173 : vector<8x128xf32>
      %175 = arith.addf %172, %174 : vector<8x128xf32>
      %176 = arith.subf %168, %170 : vector<8x128xf32>
      %177 = math.exp %176 : vector<8x128xf32>
      %178 = arith.addf %175, %177 : vector<8x128xf32>
      %179 = math.log %178 : vector<8x128xf32>
      %180 = arith.addf %170, %179 : vector<8x128xf32>
      %c0_i32 = arith.constant 0 : i32
      %181 = arith.addi %c0_i32, %arg9 : i32
      %182 = arith.index_cast %181 : i32 to index
      %c0_78 = arith.constant 0 : index
      %183 = vector.load %arg8[%182, %c0_78] : memref<128x128xf32, #tpu.memory_space<vmem>>, vector<1x128xf32>
      %c16_i32 = arith.constant 16 : i32
      %184 = arith.addi %c16_i32, %arg9 : i32
      %185 = arith.index_cast %184 : i32 to index
      %c0_79 = arith.constant 0 : index
      %186 = vector.load %arg8[%185, %c0_79] : memref<128x128xf32, #tpu.memory_space<vmem>>, vector<1x128xf32>
      %c32_i32_80 = arith.constant 32 : i32
      %187 = arith.addi %c32_i32_80, %arg9 : i32
      %188 = arith.index_cast %187 : i32 to index
      %c0_81 = arith.constant 0 : index
      %189 = vector.load %arg8[%188, %c0_81] : memref<128x128xf32, #tpu.memory_space<vmem>>, vector<1x128xf32>
      %c48_i32 = arith.constant 48 : i32
      %190 = arith.addi %c48_i32, %arg9 : i32
      %191 = arith.index_cast %190 : i32 to index
      %c0_82 = arith.constant 0 : index
      %192 = vector.load %arg8[%191, %c0_82] : memref<128x128xf32, #tpu.memory_space<vmem>>, vector<1x128xf32>
      %c64_i32 = arith.constant 64 : i32
      %193 = arith.addi %c64_i32, %arg9 : i32
      %194 = arith.index_cast %193 : i32 to index
      %c0_83 = arith.constant 0 : index
      %195 = vector.load %arg8[%194, %c0_83] : memref<128x128xf32, #tpu.memory_space<vmem>>, vector<1x128xf32>
      %c80_i32 = arith.constant 80 : i32
      %196 = arith.addi %c80_i32, %arg9 : i32
      %197 = arith.index_cast %196 : i32 to index
      %c0_84 = arith.constant 0 : index
      %198 = vector.load %arg8[%197, %c0_84] : memref<128x128xf32, #tpu.memory_space<vmem>>, vector<1x128xf32>
      %c96_i32 = arith.constant 96 : i32
      %199 = arith.addi %c96_i32, %arg9 : i32
      %200 = arith.index_cast %199 : i32 to index
      %c0_85 = arith.constant 0 : index
      %201 = vector.load %arg8[%200, %c0_85] : memref<128x128xf32, #tpu.memory_space<vmem>>, vector<1x128xf32>
      %c112_i32 = arith.constant 112 : i32
      %202 = arith.addi %c112_i32, %arg9 : i32
      %203 = arith.index_cast %202 : i32 to index
      %c0_86 = arith.constant 0 : index
      %204 = vector.load %arg8[%203, %c0_86] : memref<128x128xf32, #tpu.memory_space<vmem>>, vector<1x128xf32>
      %205 = tpu.concatenate %183, %186, %189, %192, %195, %198, %201, %204 in 0 : vector<1x128xf32>, vector<1x128xf32>, vector<1x128xf32>, vector<1x128xf32>, vector<1x128xf32>, vector<1x128xf32>, vector<1x128xf32>, vector<1x128xf32> -> vector<8x128xf32>
      %206 = arith.addf %205, %180 : vector<8x128xf32>
      %207 = vector.broadcast %arg9 : i32 to vector<8x1xi32>
      %208 = arith.cmpi slt, %207, %108 : vector<8x1xi32>
      %209 = vector.shape_cast %208 : vector<8x1xi1> to vector<8x1xi1>
      %210 = vector.broadcast %209 : vector<8x1xi1> to vector<8x128xi1>
      %211 = arith.select %210, %206, %arg10 : vector<8x128xi1>, vector<8x128xf32>
      scf.yield %211 : vector<8x128xf32>
    }
    %c2_i32_61 = arith.constant 2 : i32
    %128 = vector.broadcast %c2_i32_61 : i32 to vector<8x1xi32>
    %129 = arith.muli %128, %109 : vector<8x1xi32>
    %130 = vector.broadcast %129 : vector<8x1xi32> to vector<8x128xi32>
    %131 = arith.cmpi eq, %93, %130 : vector<8x128xi32>
    %c2_i32_62 = arith.constant 2 : i32
    %132 = vector.broadcast %c2_i32_62 : i32 to vector<8x1xi32>
    %133 = arith.muli %132, %109 : vector<8x1xi32>
    %c1_i32_63 = arith.constant 1 : i32
    %134 = vector.broadcast %c1_i32_63 : i32 to vector<8x1xi32>
    %135 = arith.subi %133, %134 : vector<8x1xi32>
    %136 = vector.broadcast %135 : vector<8x1xi32> to vector<8x128xi32>
    %137 = arith.cmpi eq, %93, %136 : vector<8x128xi32>
    %138 = arith.ori %131, %137 : vector<8x128xi1>
    %cst_64 = arith.constant -1.000000e+30 : f32
    %139 = vector.broadcast %cst_64 : f32 to vector<8x128xf32>
    %140 = arith.select %138, %127, %139 : vector<8x128xi1>, vector<8x128xf32>
    %cst_65 = arith.constant dense<0xFF800000> : vector<8xf32>
    %141 = vector.multi_reduction <maximumf>, %140, %cst_65 [1] : vector<8x128xf32> to vector<8xf32>
    %142 = vector.shape_cast %141 : vector<8xf32> to vector<8x1xf32>
    %143 = vector.broadcast %142 : vector<8x1xf32> to vector<8x128xf32>
    %144 = arith.subf %140, %143 : vector<8x128xf32>
    %145 = math.exp %144 : vector<8x128xf32>
    %cst_66 = arith.constant dense<0.000000e+00> : vector<8xf32>
    %146 = vector.multi_reduction <add>, %145, %cst_66 [1] : vector<8x128xf32> to vector<8xf32>
    %147 = vector.shape_cast %146 : vector<8xf32> to vector<8x1xf32>
    %148 = math.log %147 : vector<8x1xf32>
    %149 = arith.addf %142, %148 : vector<8x1xf32>
    %cst_67 = arith.constant 0.000000e+00 : f32
    %150 = vector.broadcast %cst_67 : f32 to vector<8x1xf32>
    %151 = arith.subf %150, %149 : vector<8x1xf32>
    %cst_68 = arith.constant -1.000000e+29 : f32
    %152 = vector.broadcast %cst_68 : f32 to vector<8x1xf32>
    %153 = arith.cmpf olt, %142, %152 : vector<8x1xf32>
    %cst_69 = arith.constant 0.000000e+00 : f32
    %154 = vector.broadcast %cst_69 : f32 to vector<8x1xf32>
    %155 = arith.select %153, %154, %151 : vector<8x1xi1>, vector<8x1xf32>
    %c1_i32_70 = arith.constant 1 : i32
    %156 = vector.broadcast %c1_i32_70 : i32 to vector<8x1xi32>
    %157 = arith.maxsi %109, %156 : vector<8x1xi32>
    %158 = arith.sitofp %157 : vector<8x1xi32> to vector<8x1xf32>
    %159 = arith.divf %155, %158 : vector<8x1xf32>
    %c0_71 = arith.constant 0 : index
    %c0_72 = arith.constant 0 : index
    %160 = vector.load %arg7[%c0_71, %c0_72] : memref<8x1xf32, #tpu.memory_space<vmem>>, vector<8x1xf32>
    tpu.vector_store %arg7[%c0_71, %c0_72], %159 {strides = array<i32>} : memref<8x1xf32, #tpu.memory_space<vmem>>, vector<8x1xf32>,
    return
  }
  func.func @transform_0(%arg0: i32, %arg1: i32, %arg2: memref<1xi32, #tpu.memory_space<smem>>) -> (i32, i32, i32) {
    %c0_i32 = arith.constant 0 : i32
    %c0_i32_0 = arith.constant 0 : i32
    return %arg0, %c0_i32, %arg1 : i32, i32, i32
  }
  func.func @transform_1(%arg0: i32, %arg1: i32, %arg2: memref<1xi32, #tpu.memory_space<smem>>) -> (i32, i32) {
    %c0_i32 = arith.constant 0 : i32
    %c0_i32_0 = arith.constant 0 : i32
    return %arg0, %c0_i32 : i32, i32
  }
  func.func @transform_2(%arg0: i32, %arg1: i32, %arg2: memref<1xi32, #tpu.memory_space<smem>>) -> (i32, i32) {
    %c0_i32 = arith.constant 0 : i32
    %c0_i32_0 = arith.constant 0 : i32
    return %arg0, %c0_i32 : i32, i32
  }
  func.func @transform_3(%arg0: i32, %arg1: i32, %arg2: memref<1xi32, #tpu.memory_space<smem>>) -> (i32, i32) {
    %c0_i32 = arith.constant 0 : i32
    %c0_i32_0 = arith.constant 0 : i32
    return %arg0, %c0_i32 : i32, i32
  }
  func.func @transform_4(%arg0: i32, %arg1: i32, %arg2: memref<1xi32, #tpu.memory_space<smem>>) -> (i32, i32) {
    %c0_i32 = arith.constant 0 : i32
    %c0_i32_0 = arith.constant 0 : i32
    return %arg0, %c0_i32 : i32, i32
  }
}

</mosaic_0001>

<llo_original>
// kernel: joint_ctc_ce_loss.3
$region0: #{joint_ctc_ce_loss.3}
  #allocation0 [shape = 'u32[]', space=smem, size = 0x4, offset = 0x4, fixed_abs, tag = 'smem constant byte address 0x4 - core index']
  #allocation1 [shape = 'u32[72,128]{1,0:T(1,128)}', space=vmem, size = 0x9000, scoped, tag = 'internal scratch']
  %s0 = inlined_call_operand.vmem [shape: f32[256,32], index: 0, kind: input, shape index: {}]
  %s1 = inlined_call_operand.vmem [shape: s32[256,1], index: 1, kind: input, shape index: {}]
  %s2 = inlined_call_operand.vmem [shape: f32[256,1], index: 2, kind: output, shape index: {}]
  %s3 = sld [smem:[#allocation0]]
  $region18: #{joint_ctc_ce_loss.3} parent=0
    _
  %s5 = ssub.s32 1, %s3
  %s6 = scalar_select 0, %s5, %s3
  // Predicated region
  $region2: #{joint_ctc_ce_loss.3} parent=0 // pred_check
    _
  $region3: #{joint_ctc_ce_loss.3} parent=0 // pred_check_branch
    %8 = sbr.rel (0) target = $region5
  $region4: #{joint_ctc_ce_loss.3} parent=0 // pred_region
    _
  $region5: #{joint_ctc_ce_loss.3} parent=0 // pred_fallthru
    _
  // Predicated region
  $region6: #{joint_ctc_ce_loss.3} parent=0 // pred_check
    _
  $region7: #{joint_ctc_ce_loss.3} parent=0 // pred_check_branch
    %10 = sbr.rel (0) target = $region9
  $region8: #{joint_ctc_ce_loss.3} parent=0 // pred_region
    _
  $region9: #{joint_ctc_ce_loss.3} parent=0 // pred_fallthru
    _
  %v11 = vld [vmem:[%s0] sm:$0xff]
  %v12 = vld [vmem:[%s0 + $0x8] sm:$0xff]
  %v13 = vld [vmem:[%s0 + $0x10] sm:$0xff]
  %v14 = vld [vmem:[%s0 + $0x18] sm:$0xff]
  %v15 = vld [vmem:[%s0 + $0x20] sm:$0xff]
  %v16 = vld [vmem:[%s0 + $0x28] sm:$0xff]
  %v17 = vld [vmem:[%s0 + $0x30] sm:$0xff]
  %v18 = vld [vmem:[%s0 + $0x38] sm:$0xff]
  %v19 = vld [vmem:[%s0 + $0x40] sm:$0xff]
  %v20 = vld [vmem:[%s0 + $0x48] sm:$0xff]
  %v21 = vld [vmem:[%s0 + $0x50] sm:$0xff]
  %v22 = vld [vmem:[%s0 + $0x58] sm:$0xff]
  %v23 = vld [vmem:[%s0 + $0x60] sm:$0xff]
  %v24 = vld [vmem:[%s0 + $0x68] sm:$0xff]
  %v25 = vld [vmem:[%s0 + $0x70] sm:$0xff]
  %v26 = vld [vmem:[%s0 + $0x78] sm:$0xff]
  %v27 = vld [vmem:[%s0 + $0x80] sm:$0xff]
  %v28 = vld [vmem:[%s0 + $0x88] sm:$0xff]
  %v29 = vld [vmem:[%s0 + $0x90] sm:$0xff]
  %v30 = vld [vmem:[%s0 + $0x98] sm:$0xff]
  %v31 = vld [vmem:[%s0 + $0xa0] sm:$0xff]
  %v32 = vld [vmem:[%s0 + $0xa8] sm:$0xff]
  %v33 = vld [vmem:[%s0 + $0xb0] sm:$0xff]
  %v34 = vld [vmem:[%s0 + $0xb8] sm:$0xff]
  %v35 = vld [vmem:[%s0 + $0xc0] sm:$0xff]
  %v36 = vld [vmem:[%s0 + $0xc8] sm:$0xff]
  %v37 = vld [vmem:[%s0 + $0xd0] sm:$0xff]
  %v38 = vld [vmem:[%s0 + $0xd8] sm:$0xff]
  %v39 = vld [vmem:[%s0 + $0xe0] sm:$0xff]
  %v40 = vld [vmem:[%s0 + $0xe8] sm:$0xff]
  %v41 = vld [vmem:[%s0 + $0xf0] sm:$0xff]
  %v42 = vld [vmem:[%s0 + $0xf8] sm:$0xff]
  %v43 = vld [vmem:[%s1] sm:$0xff]
  %v44 = vld [vmem:[%s1 + $0x8] sm:$0xff]
  %v45 = vld [vmem:[%s1 + $0x10] sm:$0xff]
  %v46 = vld [vmem:[%s1 + $0x18] sm:$0xff]
  %v47 = vld [vmem:[%s1 + $0x20] sm:$0xff]
  %v48 = vld [vmem:[%s1 + $0x28] sm:$0xff]
  %v49 = vld [vmem:[%s1 + $0x30] sm:$0xff]
  %v50 = vld [vmem:[%s1 + $0x38] sm:$0xff]
  %v51 = vld [vmem:[%s1 + $0x40] sm:$0xff]
  %v52 = vld [vmem:[%s1 + $0x48] sm:$0xff]
  %v53 = vld [vmem:[%s1 + $0x50] sm:$0xff]
  %v54 = vld [vmem:[%s1 + $0x58] sm:$0xff]
  %v55 = vld [vmem:[%s1 + $0x60] sm:$0xff]
  %v56 = vld [vmem:[%s1 + $0x68] sm:$0xff]
  %v57 = vld [vmem:[%s1 + $0x70] sm:$0xff]
  %v58 = vld [vmem:[%s1 + $0x78] sm:$0xff]
  %v59 = vld [vmem:[%s1 + $0x80] sm:$0xff]
  %v60 = vld [vmem:[%s1 + $0x88] sm:$0xff]
  %v61 = vld [vmem:[%s1 + $0x90] sm:$0xff]
  %v62 = vld [vmem:[%s1 + $0x98] sm:$0xff]
  %v63 = vld [vmem:[%s1 + $0xa0] sm:$0xff]
  %v64 = vld [vmem:[%s1 + $0xa8] sm:$0xff]
  %v65 = vld [vmem:[%s1 + $0xb0] sm:$0xff]
  %v66 = vld [vmem:[%s1 + $0xb8] sm:$0xff]
  %v67 = vld [vmem:[%s1 + $0xc0] sm:$0xff]
  %v68 = vld [vmem:[%s1 + $0xc8] sm:$0xff]
  %v69 = vld [vmem:[%s1 + $0xd0] sm:$0xff]
  %v70 = vld [vmem:[%s1 + $0xd8] sm:$0xff]
  %v71 = vld [vmem:[%s1 + $0xe0] sm:$0xff]
  %v72 = vld [vmem:[%s1 + $0xe8] sm:$0xff]
  %v73 = vld [vmem:[%s1 + $0xf0] sm:$0xff]
  %v74 = vld [vmem:[%s1 + $0xf8] sm:$0xff]
  %v75 = vlaneseq
  %v76 = vand.u32 %v75, 127
  %77 = vset.pattern.permute.xlu0 0
  %78 = vperm.xlu0 %77, %v43
  %v79 = vpop.permute.xlu0 %78
  %80 = vset.pattern.permute.xlu0 0
  %81 = vperm.xlu0 %80, %v44
  %v82 = vpop.permute.xlu0 %81
  %83 = vset.pattern.permute.xlu0 0
  %84 = vperm.xlu0 %83, %v45
  %v85 = vpop.permute.xlu0 %84
  %86 = vset.pattern.permute.xlu0 0
  %87 = vperm.xlu0 %86, %v46
  %v88 = vpop.permute.xlu0 %87
  %89 = vset.pattern.permute.xlu0 0
  %90 = vperm.xlu0 %89, %v47
  %v91 = vpop.permute.xlu0 %90
  %92 = vset.pattern.permute.xlu0 0
  %93 = vperm.xlu0 %92, %v48
  %v94 = vpop.permute.xlu0 %93
  %95 = vset.pattern.permute.xlu0 0
  %96 = vperm.xlu0 %95, %v49
  %v97 = vpop.permute.xlu0 %96
  %98 = vset.pattern.permute.xlu0 0
  %99 = vperm.xlu0 %98, %v50
  %v100 = vpop.permute.xlu0 %99
  %101 = vset.pattern.permute.xlu0 0
  %102 = vperm.xlu0 %101, %v51
  %v103 = vpop.permute.xlu0 %102
  %104 = vset.pattern.permute.xlu0 0
  %105 = vperm.xlu0 %104, %v52
  %v106 = vpop.permute.xlu0 %105
  %107 = vset.pattern.permute.xlu0 0
  %108 = vperm.xlu0 %107, %v53
  %v109 = vpop.permute.xlu0 %108
  %110 = vset.pattern.permute.xlu0 0
  %111 = vperm.xlu0 %110, %v54
  %v112 = vpop.permute.xlu0 %111
  %113 = vset.pattern.permute.xlu0 0
  %114 = vperm.xlu0 %113, %v55
  %v115 = vpop.permute.xlu0 %114
  %116 = vset.pattern.permute.xlu0 0
  %117 = vperm.xlu0 %116, %v56
  %v118 = vpop.permute.xlu0 %117
  %119 = vset.pattern.permute.xlu0 0
  %120 = vperm.xlu0 %119, %v57
  %v121 = vpop.permute.xlu0 %120
  %122 = vset.pattern.permute.xlu0 0
  %123 = vperm.xlu0 %122, %v58
  %v124 = vpop.permute.xlu0 %123
  %125 = vset.pattern.permute.xlu0 0
  %126 = vperm.xlu0 %125, %v59
  %v127 = vpop.permute.xlu0 %126
  %128 = vset.pattern.permute.xlu0 0
  %129 = vperm.xlu0 %128, %v60
  %v130 = vpop.permute.xlu0 %129
  %131 = vset.pattern.permute.xlu0 0
  %132 = vperm.xlu0 %131, %v61
  %v133 = vpop.permute.xlu0 %132
  %134 = vset.pattern.permute.xlu0 0
  %135 = vperm.xlu0 %134, %v62
  %v136 = vpop.permute.xlu0 %135
  %137 = vset.pattern.permute.xlu0 0
  %138 = vperm.xlu0 %137, %v63
  %v139 = vpop.permute.xlu0 %138
  %140 = vset.pattern.permute.xlu0 0
  %141 = vperm.xlu0 %140, %v64
  %v142 = vpop.permute.xlu0 %141
  %143 = vset.pattern.permute.xlu0 0
  %144 = vperm.xlu0 %143, %v65
  %v145 = vpop.permute.xlu0 %144
  %146 = vset.pattern.permute.xlu0 0
  %147 = vperm.xlu0 %146, %v66
  %v148 = vpop.permute.xlu0 %147
  %149 = vset.pattern.permute.xlu0 0
  %150 = vperm.xlu0 %149, %v67
  %v151 = vpop.permute.xlu0 %150
  %152 = vset.pattern.permute.xlu0 0
  %153 = vperm.xlu0 %152, %v68
  %v154 = vpop.permute.xlu0 %153
  %155 = vset.pattern.permute.xlu0 0
  %156 = vperm.xlu0 %155, %v69
  %v157 = vpop.permute.xlu0 %156
  %158 = vset.pattern.permute.xlu0 0
  %159 = vperm.xlu0 %158, %v70
  %v160 = vpop.permute.xlu0 %159
  %161 = vset.pattern.permute.xlu0 0
  %162 = vperm.xlu0 %161, %v71
  %v163 = vpop.permute.xlu0 %162
  %164 = vset.pattern.permute.xlu0 0
  %165 = vperm.xlu0 %164, %v72
  %v166 = vpop.permute.xlu0 %165
  %167 = vset.pattern.permute.xlu0 0
  %168 = vperm.xlu0 %167, %v73
  %v169 = vpop.permute.xlu0 %168
  %170 = vset.pattern.permute.xlu0 0
  %171 = vperm.xlu0 %170, %v74
  %v172 = vpop.permute.xlu0 %171
  %vm173 = vcmp.eq.s32.totalorder %v76, %v79
  %vm174 = vcmp.eq.s32.totalorder %v76, %v82
  %vm175 = vcmp.eq.s32.totalorder %v76, %v85
  %vm176 = vcmp.eq.s32.totalorder %v76, %v88
  %vm177 = vcmp.eq.s32.totalorder %v76, %v91
  %vm178 = vcmp.eq.s32.totalorder %v76, %v94
  %vm179 = vcmp.eq.s32.totalorder %v76, %v97
  %vm180 = vcmp.eq.s32.totalorder %v76, %v100
  %vm181 = vcmp.eq.s32.totalorder %v76, %v103
  %vm182 = vcmp.eq.s32.totalorder %v76, %v106
  %vm183 = vcmp.eq.s32.totalorder %v76, %v109
  %vm184 = vcmp.eq.s32.totalorder %v76, %v112
  %vm185 = vcmp.eq.s32.totalorder %v76, %v115
  %vm186 = vcmp.eq.s32.totalorder %v76, %v118
  %vm187 = vcmp.eq.s32.totalorder %v76, %v121
  %vm188 = vcmp.eq.s32.totalorder %v76, %v124
  %vm189 = vcmp.eq.s32.totalorder %v76, %v127
  %vm190 = vcmp.eq.s32.totalorder %v76, %v130
  %vm191 = vcmp.eq.s32.totalorder %v76, %v133
  %vm192 = vcmp.eq.s32.totalorder %v76, %v136
  %vm193 = vcmp.eq.s32.totalorder %v76, %v139
  %vm194 = vcmp.eq.s32.totalorder %v76, %v142
  %vm195 = vcmp.eq.s32.totalorder %v76, %v145
  %vm196 = vcmp.eq.s32.totalorder %v76, %v148
  %vm197 = vcmp.eq.s32.totalorder %v76, %v151
  %vm198 = vcmp.eq.s32.totalorder %v76, %v154
  %vm199 = vcmp.eq.s32.totalorder %v76, %v157
  %vm200 = vcmp.eq.s32.totalorder %v76, %v160
  %vm201 = vcmp.eq.s32.totalorder %v76, %v163
  %vm202 = vcmp.eq.s32.totalorder %v76, %v166
  %vm203 = vcmp.eq.s32.totalorder %v76, %v169
  %vm204 = vcmp.eq.s32.totalorder %v76, %v172
  %v205 = vsel %vm173, %v11, 0.0
  %v206 = vsel %vm174, %v12, 0.0
  %v207 = vsel %vm175, %v13, 0.0
  %v208 = vsel %vm176, %v14, 0.0
  %v209 = vsel %vm177, %v15, 0.0
  %v210 = vsel %vm178, %v16, 0.0
  %v211 = vsel %vm179, %v17, 0.0
  %v212 = vsel %vm180, %v18, 0.0
  %v213 = vsel %vm181, %v19, 0.0
  %v214 = vsel %vm182, %v20, 0.0
  %v215 = vsel %vm183, %v21, 0.0
  %v216 = vsel %vm184, %v22, 0.0
  %v217 = vsel %vm185, %v23, 0.0
  %v218 = vsel %vm186, %v24, 0.0
  %v219 = vsel %vm187, %v25, 0.0
  %v220 = vsel %vm188, %v26, 0.0
  %v221 = vsel %vm189, %v27, 0.0
  %v222 = vsel %vm190, %v28, 0.0
  %v223 = vsel %vm191, %v29, 0.0
  %v224 = vsel %vm192, %v30, 0.0
  %v225 = vsel %vm193, %v31, 0.0
  %v226 = vsel %vm194, %v32, 0.0
  %v227 = vsel %vm195, %v33, 0.0
  %v228 = vsel %vm196, %v34, 0.0
  %v229 = vsel %vm197, %v35, 0.0
  %v230 = vsel %vm198, %v36, 0.0
  %v231 = vsel %vm199, %v37, 0.0
  %v232 = vsel %vm200, %v38, 0.0
  %v233 = vsel %vm201, %v39, 0.0
  %v234 = vsel %vm202, %v40, 0.0
  %v235 = vsel %vm203, %v41, 0.0
  %v236 = vsel %vm204, %v42, 0.0
  %vm237 = vcmask 261120
  %v238 = vsel %vm237, %v205, 0.0
  %239 = vadd.xlane.f32.xlu0 %v238
  %v240 = vpop.xlane.xlu0 %239
  %v241 = vsel %vm237, %v206, 0.0
  %242 = vadd.xlane.f32.xlu0 %v241
  %v243 = vpop.xlane.xlu0 %242
  %v244 = vsel %vm237, %v207, 0.0
  %245 = vadd.xlane.f32.xlu0 %v244
  %v246 = vpop.xlane.xlu0 %245
  %v247 = vsel %vm237, %v208, 0.0
  %248 = vadd.xlane.f32.xlu0 %v247
  %v249 = vpop.xlane.xlu0 %248
  %v250 = vsel %vm237, %v209, 0.0
  %251 = vadd.xlane.f32.xlu0 %v250
  %v252 = vpop.xlane.xlu0 %251
  %v253 = vsel %vm237, %v210, 0.0
  %254 = vadd.xlane.f32.xlu0 %v253
  %v255 = vpop.xlane.xlu0 %254
  %v256 = vsel %vm237, %v211, 0.0
  %257 = vadd.xlane.f32.xlu0 %v256
  %v258 = vpop.xlane.xlu0 %257
  %v259 = vsel %vm237, %v212, 0.0
  %260 = vadd.xlane.f32.xlu0 %v259
  %v261 = vpop.xlane.xlu0 %260
  %v262 = vsel %vm237, %v213, 0.0
  %263 = vadd.xlane.f32.xlu0 %v262
  %v264 = vpop.xlane.xlu0 %263
  %v265 = vsel %vm237, %v214, 0.0
  %266 = vadd.xlane.f32.xlu0 %v265
  %v267 = vpop.xlane.xlu0 %266
  %v268 = vsel %vm237, %v215, 0.0
  %269 = vadd.xlane.f32.xlu0 %v268
  %v270 = vpop.xlane.xlu0 %269
  %v271 = vsel %vm237, %v216, 0.0
  %272 = vadd.xlane.f32.xlu0 %v271
  %v273 = vpop.xlane.xlu0 %272
  %v274 = vsel %vm237, %v217, 0.0
  %275 = vadd.xlane.f32.xlu0 %v274
  %v276 = vpop.xlane.xlu0 %275
  %v277 = vsel %vm237, %v218, 0.0
  %278 = vadd.xlane.f32.xlu0 %v277
  %v279 = vpop.xlane.xlu0 %278
  %v280 = vsel %vm237, %v219, 0.0
  %281 = vadd.xlane.f32.xlu0 %v280
  %v282 = vpop.xlane.xlu0 %281
  %v283 = vsel %vm237, %v220, 0.0
  %284 = vadd.xlane.f32.xlu0 %v283
  %v285 = vpop.xlane.xlu0 %284
  %v286 = vsel %vm237, %v221, 0.0
  %287 = vadd.xlane.f32.xlu0 %v286
  %v288 = vpop.xlane.xlu0 %287
  %v289 = vsel %vm237, %v222, 0.0
  %290 = vadd.xlane.f32.xlu0 %v289
  %v291 = vpop.xlane.xlu0 %290
  %v292 = vsel %vm237, %v223, 0.0
  %293 = vadd.xlane.f32.xlu0 %v292
  %v294 = vpop.xlane.xlu0 %293
  %v295 = vsel %vm237, %v224, 0.0
  %296 = vadd.xlane.f32.xlu0 %v295
  %v297 = vpop.xlane.xlu0 %296
  %v298 = vsel %vm237, %v225, 0.0
  %299 = vadd.xlane.f32.xlu0 %v298
  %v300 = vpop.xlane.xlu0 %299
  %v301 = vsel %vm237, %v226, 0.0
  %302 = vadd.xlane.f32.xlu0 %v301
  %v303 = vpop.xlane.xlu0 %302
  %v304 = vsel %vm237, %v227, 0.0
  %305 = vadd.xlane.f32.xlu0 %v304
  %v306 = vpop.xlane.xlu0 %305
  %v307 = vsel %vm237, %v228, 0.0
  %308 = vadd.xlane.f32.xlu0 %v307
  %v309 = vpop.xlane.xlu0 %308
  %v310 = vsel %vm237, %v229, 0.0
  %311 = vadd.xlane.f32.xlu0 %v310
  %v312 = vpop.xlane.xlu0 %311
  %v313 = vsel %vm237, %v230, 0.0
  %314 = vadd.xlane.f32.xlu0 %v313
  %v315 = vpop.xlane.xlu0 %314
  %v316 = vsel %vm237, %v231, 0.0
  %317 = vadd.xlane.f32.xlu0 %v316
  %v318 = vpop.xlane.xlu0 %317
  %v319 = vsel %vm237, %v232, 0.0
  %320 = vadd.xlane.f32.xlu0 %v319
  %v321 = vpop.xlane.xlu0 %320
  %v322 = vsel %vm237, %v233, 0.0
  %323 = vadd.xlane.f32.xlu0 %v322
  %v324 = vpop.xlane.xlu0 %323
  %v325 = vsel %vm237, %v234, 0.0
  %326 = vadd.xlane.f32.xlu0 %v325
  %v327 = vpop.xlane.xlu0 %326
  %v328 = vsel %vm237, %v235, 0.0
  %329 = vadd.xlane.f32.xlu0 %v328
  %v330 = vpop.xlane.xlu0 %329
  %v331 = vsel %vm237, %v236, 0.0
  %332 = vadd.xlane.f32.xlu0 %v331
  %v333 = vpop.xlane.xlu0 %332
  %v334 = vsel %vm237, %v11, -inf
  %335 = vmax.xlane.f32.xlu0 %v334
  %v336 = vpop.xlane.xlu0 %335
  %v337 = vsel %vm237, %v12, -inf
  %338 = vmax.xlane.f32.xlu0 %v337
  %v339 = vpop.xlane.xlu0 %338
  %v340 = vsel %vm237, %v13, -inf
  %341 = vmax.xlane.f32.xlu0 %v340
  %v342 = vpop.xlane.xlu0 %341
  %v343 = vsel %vm237, %v14, -inf
  %344 = vmax.xlane.f32.xlu0 %v343
  %v345 = vpop.xlane.xlu0 %344
  %v346 = vsel %vm237, %v15, -inf
  %347 = vmax.xlane.f32.xlu0 %v346
  %v348 = vpop.xlane.xlu0 %347
  %v349 = vsel %vm237, %v16, -inf
  %350 = vmax.xlane.f32.xlu0 %v349
  %v351 = vpop.xlane.xlu0 %350
  %v352 = vsel %vm237, %v17, -inf
  %353 = vmax.xlane.f32.xlu0 %v352
  %v354 = vpop.xlane.xlu0 %353
  %v355 = vsel %vm237, %v18, -inf
  %356 = vmax.xlane.f32.xlu0 %v355
  %v357 = vpop.xlane.xlu0 %356
  %v358 = vsel %vm237, %v19, -inf
  %359 = vmax.xlane.f32.xlu0 %v358
  %v360 = vpop.xlane.xlu0 %359
  %v361 = vsel %vm237, %v20, -inf
  %362 = vmax.xlane.f32.xlu0 %v361
  %v363 = vpop.xlane.xlu0 %362
  %v364 = vsel %vm237, %v21, -inf
  %365 = vmax.xlane.f32.xlu0 %v364
  %v366 = vpop.xlane.xlu0 %365
  %v367 = vsel %vm237, %v22, -inf
  %368 = vmax.xlane.f32.xlu0 %v367
  %v369 = vpop.xlane.xlu0 %368
  %v370 = vsel %vm237, %v23, -inf
  %371 = vmax.xlane.f32.xlu0 %v370
  %v372 = vpop.xlane.xlu0 %371
  %v373 = vsel %vm237, %v24, -inf
  %374 = vmax.xlane.f32.xlu0 %v373
  %v375 = vpop.xlane.xlu0 %374
  %v376 = vsel %vm237, %v25, -inf
  %377 = vmax.xlane.f32.xlu0 %v376
  %v378 = vpop.xlane.xlu0 %377
  %v379 = vsel %vm237, %v26, -inf
  %380 = vmax.xlane.f32.xlu0 %v379
  %v381 = vpop.xlane.xlu0 %380
  %v382 = vsel %vm237, %v27, -inf
  %383 = vmax.xlane.f32.xlu0 %v382
  %v384 = vpop.xlane.xlu0 %383
  %v385 = vsel %vm237, %v28, -inf
  %386 = vmax.xlane.f32.xlu0 %v385
  %v387 = vpop.xlane.xlu0 %386
  %v388 = vsel %vm237, %v29, -inf
  %389 = vmax.xlane.f32.xlu0 %v388
  %v390 = vpop.xlane.xlu0 %389
  %v391 = vsel %vm237, %v30, -inf
  %392 = vmax.xlane.f32.xlu0 %v391
  %v393 = vpop.xlane.xlu0 %392
  %v394 = vsel %vm237, %v31, -inf
  %395 = vmax.xlane.f32.xlu0 %v394
  %v396 = vpop.xlane.xlu0 %395
  %v397 = vsel %vm237, %v32, -inf
  %398 = vmax.xlane.f32.xlu0 %v397
  %v399 = vpop.xlane.xlu0 %398
  %v400 = vsel %vm237, %v33, -inf
  %401 = vmax.xlane.f32.xlu0 %v400
  %v402 = vpop.xlane.xlu0 %401
  %v403 = vsel %vm237, %v34, -inf
  %404 = vmax.xlane.f32.xlu0 %v403
  %v405 = vpop.xlane.xlu0 %404
  %v406 = vsel %vm237, %v35, -inf
  %407 = vmax.xlane.f32.xlu0 %v406
  %v408 = vpop.xlane.xlu0 %407
  %v409 = vsel %vm237, %v36, -inf
  %410 = vmax.xlane.f32.xlu0 %v409
  %v411 = vpop.xlane.xlu0 %410
  %v412 = vsel %vm237, %v37, -inf
  %413 = vmax.xlane.f32.xlu0 %v412
  %v414 = vpop.xlane.xlu0 %413
  %v415 = vsel %vm237, %v38, -inf
  %416 = vmax.xlane.f32.xlu0 %v415
  %v417 = vpop.xlane.xlu0 %416
  %v418 = vsel %vm237, %v39, -inf
  %419 = vmax.xlane.f32.xlu0 %v418
  %v420 = vpop.xlane.xlu0 %419
  %v421 = vsel %vm237, %v40, -inf
  %422 = vmax.xlane.f32.xlu0 %v421
  %v423 = vpop.xlane.xlu0 %422
  %v424 = vsel %vm237, %v41, -inf
  %425 = vmax.xlane.f32.xlu0 %v424
  %v426 = vpop.xlane.xlu0 %425
  %v427 = vsel %vm237, %v42, -inf
  %428 = vmax.xlane.f32.xlu0 %v427
  %v429 = vpop.xlane.xlu0 %428
  %v430 = vsub.f32 %v11, %v336
  %v431 = vsub.f32 %v12, %v339
  %v432 = vsub.f32 %v13, %v342
  %v433 = vsub.f32 %v14, %v345
  %v434 = vsub.f32 %v15, %v348
  %v435 = vsub.f32 %v16, %v351
  %v436 = vsub.f32 %v17, %v354
  %v437 = vsub.f32 %v18, %v357
  %v438 = vsub.f32 %v19, %v360
  %v439 = vsub.f32 %v20, %v363
  %v440 = vsub.f32 %v21, %v366
  %v441 = vsub.f32 %v22, %v369
  %v442 = vsub.f32 %v23, %v372
  %v443 = vsub.f32 %v24, %v375
  %v444 = vsub.f32 %v25, %v378
  %v445 = vsub.f32 %v26, %v381
  %v446 = vsub.f32 %v27, %v384
  %v447 = vsub.f32 %v28, %v387
  %v448 = vsub.f32 %v29, %v390
  %v449 = vsub.f32 %v30, %v393
  %v450 = vsub.f32 %v31, %v396
  %v451 = vsub.f32 %v32, %v399
  %v452 = vsub.f32 %v33, %v402
  %v453 = vsub.f32 %v34, %v405
  %v454 = vsub.f32 %v35, %v408
  %v455 = vsub.f32 %v36, %v411
  %v456 = vsub.f32 %v37, %v414
  %v457 = vsub.f32 %v38, %v417
  %v458 = vsub.f32 %v39, %v420
  %v459 = vsub.f32 %v40, %v423
  %v460 = vsub.f32 %v41, %v426
  %v461 = vsub.f32 %v42, %v429
  %v462 = vmul.f32 %v430, 1.442695
  %v463 = vpow.pop %v462
  %v464 = vmul.f32 %v431, 1.442695
  %v465 = vpow.pop %v464
  %v466 = vmul.f32 %v432, 1.442695
  %v467 = vpow.pop %v466
  %v468 = vmul.f32 %v433, 1.442695
  %v469 = vpow.pop %v468
  %v470 = vmul.f32 %v434, 1.442695
  %v471 = vpow.pop %v470
  %v472 = vmul.f32 %v435, 1.442695
  %v473 = vpow.pop %v472
  %v474 = vmul.f32 %v436, 1.442695
  %v475 = vpow.pop %v474
  %v476 = vmul.f32 %v437, 1.442695
  %v477 = vpow.pop %v476
  %v478 = vmul.f32 %v438, 1.442695
  %v479 = vpow.pop %v478
  %v480 = vmul.f32 %v439, 1.442695
  %v481 = vpow.pop %v480
  %v482 = vmul.f32 %v440, 1.442695
  %v483 = vpow.pop %v482
  %v484 = vmul.f32 %v441, 1.442695
  %v485 = vpow.pop %v484
  %v486 = vmul.f32 %v442, 1.442695
  %v487 = vpow.pop %v486
  %v488 = vmul.f32 %v443, 1.442695
  %v489 = vpow.pop %v488
  %v490 = vmul.f32 %v444, 1.442695
  %v491 = vpow.pop %v490
  %v492 = vmul.f32 %v445, 1.442695
  %v493 = vpow.pop %v492
  %v494 = vmul.f32 %v446, 1.442695
  %v495 = vpow.pop %v494
  %v496 = vmul.f32 %v447, 1.442695
  %v497 = vpow.pop %v496
  %v498 = vmul.f32 %v448, 1.442695
  %v499 = vpow.pop %v498
  %v500 = vmul.f32 %v449, 1.442695
  %v501 = vpow.pop %v500
  %v502 = vmul.f32 %v450, 1.442695
  %v503 = vpow.pop %v502
  %v504 = vmul.f32 %v451, 1.442695
  %v505 = vpow.pop %v504
  %v506 = vmul.f32 %v452, 1.442695
  %v507 = vpow.pop %v506
  %v508 = vmul.f32 %v453, 1.442695
  %v509 = vpow.pop %v508
  %v510 = vmul.f32 %v454, 1.442695
  %v511 = vpow.pop %v510
  %v512 = vmul.f32 %v455, 1.442695
  %v513 = vpow.pop %v512
  %v514 = vmul.f32 %v456, 1.442695
  %v515 = vpow.pop %v514
  %v516 = vmul.f32 %v457, 1.442695
  %v517 = vpow.pop %v516
  %v518 = vmul.f32 %v458, 1.442695
  %v519 = vpow.pop %v518
  %v520 = vmul.f32 %v459, 1.442695
  %v521 = vpow.pop %v520
  %v522 = vmul.f32 %v460, 1.442695
  %v523 = vpow.pop %v522
  %v524 = vmul.f32 %v461, 1.442695
  %v525 = vpow.pop %v524
  %v526 = vsel %vm237, %v463, 0.0
  %527 = vadd.xlane.f32.xlu0 %v526
  %v528 = vpop.xlane.xlu0 %527
  %v529 = vsel %vm237, %v465, 0.0
  %530 = vadd.xlane.f32.xlu0 %v529
  %v531 = vpop.xlane.xlu0 %530
  %v532 = vsel %vm237, %v467, 0.0
  %533 = vadd.xlane.f32.xlu0 %v532
  %v534 = vpop.xlane.xlu0 %533
  %v535 = vsel %vm237, %v469, 0.0
  %536 = vadd.xlane.f32.xlu0 %v535
  %v537 = vpop.xlane.xlu0 %536
  %v538 = vsel %vm237, %v471, 0.0
  %539 = vadd.xlane.f32.xlu0 %v538
  %v540 = vpop.xlane.xlu0 %539
  %v541 = vsel %vm237, %v473, 0.0
  %542 = vadd.xlane.f32.xlu0 %v541
  %v543 = vpop.xlane.xlu0 %542
  %v544 = vsel %vm237, %v475, 0.0
  %545 = vadd.xlane.f32.xlu0 %v544
  %v546 = vpop.xlane.xlu0 %545
  %v547 = vsel %vm237, %v477, 0.0
  %548 = vadd.xlane.f32.xlu0 %v547
  %v549 = vpop.xlane.xlu0 %548
  %v550 = vsel %vm237, %v479, 0.0
  %551 = vadd.xlane.f32.xlu0 %v550
  %v552 = vpop.xlane.xlu0 %551
  %v553 = vsel %vm237, %v481, 0.0
  %554 = vadd.xlane.f32.xlu0 %v553
  %v555 = vpop.xlane.xlu0 %554
  %v556 = vsel %vm237, %v483, 0.0
  %557 = vadd.xlane.f32.xlu0 %v556
  %v558 = vpop.xlane.xlu0 %557
  %v559 = vsel %vm237, %v485, 0.0
  %560 = vadd.xlane.f32.xlu0 %v559
  %v561 = vpop.xlane.xlu0 %560
  %v562 = vsel %vm237, %v487, 0.0
  %563 = vadd.xlane.f32.xlu0 %v562
  %v564 = vpop.xlane.xlu0 %563
  %v565 = vsel %vm237, %v489, 0.0
  %566 = vadd.xlane.f32.xlu0 %v565
  %v567 = vpop.xlane.xlu0 %566
  %v568 = vsel %vm237, %v491, 0.0
  %569 = vadd.xlane.f32.xlu0 %v568
  %v570 = vpop.xlane.xlu0 %569
  %v571 = vsel %vm237, %v493, 0.0
  %572 = vadd.xlane.f32.xlu0 %v571
  %v573 = vpop.xlane.xlu0 %572
  %v574 = vsel %vm237, %v495, 0.0
  %575 = vadd.xlane.f32.xlu0 %v574
  %v576 = vpop.xlane.xlu0 %575
  %v577 = vsel %vm237, %v497, 0.0
  %578 = vadd.xlane.f32.xlu0 %v577
  %v579 = vpop.xlane.xlu0 %578
  %v580 = vsel %vm237, %v499, 0.0
  %581 = vadd.xlane.f32.xlu0 %v580
  %v582 = vpop.xlane.xlu0 %581
  %v583 = vsel %vm237, %v501, 0.0
  %584 = vadd.xlane.f32.xlu0 %v583
  %v585 = vpop.xlane.xlu0 %584
  %v586 = vsel %vm237, %v503, 0.0
  %587 = vadd.xlane.f32.xlu0 %v586
  %v588 = vpop.xlane.xlu0 %587
  %v589 = vsel %vm237, %v505, 0.0
  %590 = vadd.xlane.f32.xlu0 %v589
  %v591 = vpop.xlane.xlu0 %590
  %v592 = vsel %vm237, %v507, 0.0
  %593 = vadd.xlane.f32.xlu0 %v592
  %v594 = vpop.xlane.xlu0 %593
  %v595 = vsel %vm237, %v509, 0.0
  %596 = vadd.xlane.f32.xlu0 %v595
  %v597 = vpop.xlane.xlu0 %596
  %v598 = vsel %vm237, %v511, 0.0
  %599 = vadd.xlane.f32.xlu0 %v598
  %v600 = vpop.xlane.xlu0 %599
  %v601 = vsel %vm237, %v513, 0.0
  %602 = vadd.xlane.f32.xlu0 %v601
  %v603 = vpop.xlane.xlu0 %602
  %v604 = vsel %vm237, %v515, 0.0
  %605 = vadd.xlane.f32.xlu0 %v604
  %v606 = vpop.xlane.xlu0 %605
  %v607 = vsel %vm237, %v517, 0.0
  %608 = vadd.xlane.f32.xlu0 %v607
  %v609 = vpop.xlane.xlu0 %608
  %v610 = vsel %vm237, %v519, 0.0
  %611 = vadd.xlane.f32.xlu0 %v610
  %v612 = vpop.xlane.xlu0 %611
  %v613 = vsel %vm237, %v521, 0.0
  %614 = vadd.xlane.f32.xlu0 %v613
  %v615 = vpop.xlane.xlu0 %614
  %v616 = vsel %vm237, %v523, 0.0
  %617 = vadd.xlane.f32.xlu0 %v616
  %v618 = vpop.xlane.xlu0 %617
  %v619 = vsel %vm237, %v525, 0.0
  %620 = vadd.xlane.f32.xlu0 %v619
  %v621 = vpop.xlane.xlu0 %620
  %v622 = vlog2.pop %v528
  %v623 = vmul.f32 %v622, 0.6931472
  %v624 = vlog2.pop %v531
  %v625 = vmul.f32 %v624, 0.6931472
  %v626 = vlog2.pop %v534
  %v627 = vmul.f32 %v626, 0.6931472
  %v628 = vlog2.pop %v537
  %v629 = vmul.f32 %v628, 0.6931472
  %v630 = vlog2.pop %v540
  %v631 = vmul.f32 %v630, 0.6931472
  %v632 = vlog2.pop %v543
  %v633 = vmul.f32 %v632, 0.6931472
  %v634 = vlog2.pop %v546
  %v635 = vmul.f32 %v634, 0.6931472
  %v636 = vlog2.pop %v549
  %v637 = vmul.f32 %v636, 0.6931472
  %v638 = vlog2.pop %v552
  %v639 = vmul.f32 %v638, 0.6931472
  %v640 = vlog2.pop %v555
  %v641 = vmul.f32 %v640, 0.6931472
  %v642 = vlog2.pop %v558
  %v643 = vmul.f32 %v642, 0.6931472
  %v644 = vlog2.pop %v561
  %v645 = vmul.f32 %v644, 0.6931472
  %v646 = vlog2.pop %v564
  %v647 = vmul.f32 %v646, 0.6931472
  %v648 = vlog2.pop %v567
  %v649 = vmul.f32 %v648, 0.6931472
  %v650 = vlog2.pop %v570
  %v651 = vmul.f32 %v650, 0.6931472
  %v652 = vlog2.pop %v573
  %v653 = vmul.f32 %v652, 0.6931472
  %v654 = vlog2.pop %v576
  %v655 = vmul.f32 %v654, 0.6931472
  %v656 = vlog2.pop %v579
  %v657 = vmul.f32 %v656, 0.6931472
  %v658 = vlog2.pop %v582
  %v659 = vmul.f32 %v658, 0.6931472
  %v660 = vlog2.pop %v585
  %v661 = vmul.f32 %v660, 0.6931472
  %v662 = vlog2.pop %v588
  %v663 = vmul.f32 %v662, 0.6931472
  %v664 = vlog2.pop %v591
  %v665 = vmul.f32 %v664, 0.6931472
  %v666 = vlog2.pop %v594
  %v667 = vmul.f32 %v666, 0.6931472
  %v668 = vlog2.pop %v597
  %v669 = vmul.f32 %v668, 0.6931472
  %v670 = vlog2.pop %v600
  %v671 = vmul.f32 %v670, 0.6931472
  %v672 = vlog2.pop %v603
  %v673 = vmul.f32 %v672, 0.6931472
  %v674 = vlog2.pop %v606
  %v675 = vmul.f32 %v674, 0.6931472
  %v676 = vlog2.pop %v609
  %v677 = vmul.f32 %v676, 0.6931472
  %v678 = vlog2.pop %v612
  %v679 = vmul.f32 %v678, 0.6931472
  %v680 = vlog2.pop %v615
  %v681 = vmul.f32 %v680, 0.6931472
  %v682 = vlog2.pop %v618
  %v683 = vmul.f32 %v682, 0.6931472
  %v684 = vlog2.pop %v621
  %v685 = vmul.f32 %v684, 0.6931472
  %v686 = vadd.f32 %v336, %v623
  %v687 = vadd.f32 %v339, %v625
  %v688 = vadd.f32 %v342, %v627
  %v689 = vadd.f32 %v345, %v629
  %v690 = vadd.f32 %v348, %v631
  %v691 = vadd.f32 %v351, %v633
  %v692 = vadd.f32 %v354, %v635
  %v693 = vadd.f32 %v357, %v637
  %v694 = vadd.f32 %v360, %v639
  %v695 = vadd.f32 %v363, %v641
  %v696 = vadd.f32 %v366, %v643
  %v697 = vadd.f32 %v369, %v645
  %v698 = vadd.f32 %v372, %v647
  %v699 = vadd.f32 %v375, %v649
  %v700 = vadd.f32 %v378, %v651
  %v701 = vadd.f32 %v381, %v653
  %v702 = vadd.f32 %v384, %v655
  %v703 = vadd.f32 %v387, %v657
  %v704 = vadd.f32 %v390, %v659
  %v705 = vadd.f32 %v393, %v661
  %v706 = vadd.f32 %v396, %v663
  %v707 = vadd.f32 %v399, %v665
  %v708 = vadd.f32 %v402, %v667
  %v709 = vadd.f32 %v405, %v669
  %v710 = vadd.f32 %v408, %v671
  %v711 = vadd.f32 %v411, %v673
  %v712 = vadd.f32 %v414, %v675
  %v713 = vadd.f32 %v417, %v677
  %v714 = vadd.f32 %v420, %v679
  %v715 = vadd.f32 %v423, %v681
  %v716 = vadd.f32 %v426, %v683
  %v717 = vadd.f32 %v429, %v685
  %vm718 = vcmp.ne.s32.totalorder %v43, 0
  %vm719 = vcmp.ne.s32.totalorder %v44, 0
  %vm720 = vcmp.ne.s32.totalorder %v45, 0
  %vm721 = vcmp.ne.s32.totalorder %v46, 0
  %vm722 = vcmp.ne.s32.totalorder %v47, 0
  %vm723 = vcmp.ne.s32.totalorder %v48, 0
  %vm724 = vcmp.ne.s32.totalorder %v49, 0
  %vm725 = vcmp.ne.s32.totalorder %v50, 0
  %vm726 = vcmp.ne.s32.totalorder %v51, 0
  %vm727 = vcmp.ne.s32.totalorder %v52, 0
  %vm728 = vcmp.ne.s32.totalorder %v53, 0
  %vm729 = vcmp.ne.s32.totalorder %v54, 0
  %vm730 = vcmp.ne.s32.totalorder %v55, 0
  %vm731 = vcmp.ne.s32.totalorder %v56, 0
  %vm732 = vcmp.ne.s32.totalorder %v57, 0
  %vm733 = vcmp.ne.s32.totalorder %v58, 0
  %vm734 = vcmp.ne.s32.totalorder %v59, 0
  %vm735 = vcmp.ne.s32.totalorder %v60, 0
  %vm736 = vcmp.ne.s32.totalorder %v61, 0
  %vm737 = vcmp.ne.s32.totalorder %v62, 0
  %vm738 = vcmp.ne.s32.totalorder %v63, 0
  %vm739 = vcmp.ne.s32.totalorder %v64, 0
  %vm740 = vcmp.ne.s32.totalorder %v65, 0
  %vm741 = vcmp.ne.s32.totalorder %v66, 0
  %vm742 = vcmp.ne.s32.totalorder %v67, 0
  %vm743 = vcmp.ne.s32.totalorder %v68, 0
  %vm744 = vcmp.ne.s32.totalorder %v69, 0
  %vm745 = vcmp.ne.s32.totalorder %v70, 0
  %vm746 = vcmp.ne.s32.totalorder %v71, 0
  %vm747 = vcmp.ne.s32.totalorder %v72, 0
  %vm748 = vcmp.ne.s32.totalorder %v73, 0
  %vm749 = vcmp.ne.s32.totalorder %v74, 0
  %v750 = vsub.f32 %v686, %v240
  %v751 = vsub.f32 %v687, %v243
  %v752 = vsub.f32 %v688, %v246
  %v753 = vsub.f32 %v689, %v249
  %v754 = vsub.f32 %v690, %v252
  %v755 = vsub.f32 %v691, %v255
  %v756 = vsub.f32 %v692, %v258
  %v757 = vsub.f32 %v693, %v261
  %v758 = vsub.f32 %v694, %v264
  %v759 = vsub.f32 %v695, %v267
  %v760 = vsub.f32 %v696, %v270
  %v761 = vsub.f32 %v697, %v273
  %v762 = vsub.f32 %v698, %v276
  %v763 = vsub.f32 %v699, %v279
  %v764 = vsub.f32 %v700, %v282
  %v765 = vsub.f32 %v701, %v285
  %v766 = vsub.f32 %v702, %v288
  %v767 = vsub.f32 %v703, %v291
  %v768 = vsub.f32 %v704, %v294
  %v769 = vsub.f32 %v705, %v297
  %v770 = vsub.f32 %v706, %v300
  %v771 = vsub.f32 %v707, %v303
  %v772 = vsub.f32 %v708, %v306
  %v773 = vsub.f32 %v709, %v309
  %v774 = vsub.f32 %v710, %v312
  %v775 = vsub.f32 %v711, %v315
  %v776 = vsub.f32 %v712, %v318
  %v777 = vsub.f32 %v713, %v321
  %v778 = vsub.f32 %v714, %v324
  %v779 = vsub.f32 %v715, %v327
  %v780 = vsub.f32 %v716, %v330
  %v781 = vsub.f32 %v717, %v333
  %v782 = vsel %vm718, %v750, 0.0
  %v783 = vsel %vm719, %v751, 0.0
  %v784 = vsel %vm720, %v752, 0.0
  %v785 = vsel %vm721, %v753, 0.0
  %v786 = vsel %vm722, %v754, 0.0
  %v787 = vsel %vm723, %v755, 0.0
  %v788 = vsel %vm724, %v756, 0.0
  %v789 = vsel %vm725, %v757, 0.0
  %v790 = vsel %vm726, %v758, 0.0
  %v791 = vsel %vm727, %v759, 0.0
  %v792 = vsel %vm728, %v760, 0.0
  %v793 = vsel %vm729, %v761, 0.0
  %v794 = vsel %vm730, %v762, 0.0
  %v795 = vsel %vm731, %v763, 0.0
  %v796 = vsel %vm732, %v764, 0.0
  %v797 = vsel %vm733, %v765, 0.0
  %v798 = vsel %vm734, %v766, 0.0
  %v799 = vsel %vm735, %v767, 0.0
  %v800 = vsel %vm736, %v768, 0.0
  %v801 = vsel %vm737, %v769, 0.0
  %v802 = vsel %vm738, %v770, 0.0
  %v803 = vsel %vm739, %v771, 0.0
  %v804 = vsel %vm740, %v772, 0.0
  %v805 = vsel %vm741, %v773, 0.0
  %v806 = vsel %vm742, %v774, 0.0
  %v807 = vsel %vm743, %v775, 0.0
  %v808 = vsel %vm744, %v776, 0.0
  %v809 = vsel %vm745, %v777, 0.0
  %v810 = vsel %vm746, %v778, 0.0
  %v811 = vsel %vm747, %v779, 0.0
  %v812 = vsel %vm748, %v780, 0.0
  %v813 = vsel %vm749, %v781, 0.0
  %vm814 = vcmask 7168
  %815 = vst.msk [vmem:[%s2] sm:$0xff] %vm814, %v782
  %816 = vst.msk [vmem:[%s2 + $0x8] sm:$0xff] %vm814, %v783
  %817 = vst.msk [vmem:[%s2 + $0x10] sm:$0xff] %vm814, %v784
  %818 = vst.msk [vmem:[%s2 + $0x18] sm:$0xff] %vm814, %v785
  %819 = vst.msk [vmem:[%s2 + $0x20] sm:$0xff] %vm814, %v786
  %820 = vst.msk [vmem:[%s2 + $0x28] sm:$0xff] %vm814, %v787
  %821 = vst.msk [vmem:[%s2 + $0x30] sm:$0xff] %vm814, %v788
  %822 = vst.msk [vmem:[%s2 + $0x38] sm:$0xff] %vm814, %v789
  %823 = vst.msk [vmem:[%s2 + $0x40] sm:$0xff] %vm814, %v790
  %824 = vst.msk [vmem:[%s2 + $0x48] sm:$0xff] %vm814, %v791
  %825 = vst.msk [vmem:[%s2 + $0x50] sm:$0xff] %vm814, %v792
  %826 = vst.msk [vmem:[%s2 + $0x58] sm:$0xff] %vm814, %v793
  %827 = vst.msk [vmem:[%s2 + $0x60] sm:$0xff] %vm814, %v794
  %828 = vst.msk [vmem:[%s2 + $0x68] sm:$0xff] %vm814, %v795
  %829 = vst.msk [vmem:[%s2 + $0x70] sm:$0xff] %vm814, %v796
  %830 = vst.msk [vmem:[%s2 + $0x78] sm:$0xff] %vm814, %v797
  %831 = vst.msk [vmem:[%s2 + $0x80] sm:$0xff] %vm814, %v798
  %832 = vst.msk [vmem:[%s2 + $0x88] sm:$0xff] %vm814, %v799
  %833 = vst.msk [vmem:[%s2 + $0x90] sm:$0xff] %vm814, %v800
  %834 = vst.msk [vmem:[%s2 + $0x98] sm:$0xff] %vm814, %v801
  %835 = vst.msk [vmem:[%s2 + $0xa0] sm:$0xff] %vm814, %v802
  %836 = vst.msk [vmem:[%s2 + $0xa8] sm:$0xff] %vm814, %v803
  %837 = vst.msk [vmem:[%s2 + $0xb0] sm:$0xff] %vm814, %v804
  %838 = vst.msk [vmem:[%s2 + $0xb8] sm:$0xff] %vm814, %v805
  %839 = vst.msk [vmem:[%s2 + $0xc0] sm:$0xff] %vm814, %v806
  %840 = vst.msk [vmem:[%s2 + $0xc8] sm:$0xff] %vm814, %v807
  %841 = vst.msk [vmem:[%s2 + $0xd0] sm:$0xff] %vm814, %v808
  %842 = vst.msk [vmem:[%s2 + $0xd8] sm:$0xff] %vm814, %v809
  %843 = vst.msk [vmem:[%s2 + $0xe0] sm:$0xff] %vm814, %v810
  %844 = vst.msk [vmem:[%s2 + $0xe8] sm:$0xff] %vm814, %v811
  %845 = vst.msk [vmem:[%s2 + $0xf0] sm:$0xff] %vm814, %v812
  %846 = vst.msk [vmem:[%s2 + $0xf8] sm:$0xff] %vm814, %v813
  // Predicated region
  $region10: #{joint_ctc_ce_loss.3} parent=0 // pred_check
    _
  $region11: #{joint_ctc_ce_loss.3} parent=0 // pred_check_branch
    %848 = sbr.rel (0) target = $region13
  $region12: #{joint_ctc_ce_loss.3} parent=0 // pred_region
    _
  $region13: #{joint_ctc_ce_loss.3} parent=0 // pred_fallthru
    _
  // Predicated region
  $region14: #{joint_ctc_ce_loss.3} parent=0 // pred_check
    _
  $region15: #{joint_ctc_ce_loss.3} parent=0 // pred_check_branch
    %850 = sbr.rel (0) target = $region17
  $region16: #{joint_ctc_ce_loss.3} parent=0 // pred_region
    _
  $region17: #{joint_ctc_ce_loss.3} parent=0 // pred_fallthru
    _

// kernel: joint_ctc_ce_loss.2
$region0: #{joint_ctc_ce_loss.2}
  #allocation0 [shape = 'u32[]', space=smem, size = 0x4, offset = 0x4, fixed_abs, tag = 'smem constant byte address 0x4 - core index']
  #allocation1 [shape = 'u32[72,128]{1,0:T(1,128)}', space=vmem, size = 0x9000, scoped, tag = 'internal scratch']
  #allocation2 [shape = 'f32[128,128]{1,0:T(8,128)}', space=vmem, size = 0x10000, scoped, tag = 'scratch operand']
  #allocation3 [shape = 's32[1]{0}', space=sflag, size = 0x4, scoped, tag = 'scoped memory for joint_ctc_ce_loss.2']
  #allocation4 [shape = 's32[1]{0:T(128)S(6)}', space=smem, size = 0x200, scoped, tag = 'prefetched SMEM operand 0']
  %s0 = inlined_call_operand.<no memory space> [shape: s32[1], index: 0, kind: input, shape index: {}]
  %s1 = inlined_call_operand.vmem [shape: f32[8,16,32], index: 1, kind: input, shape index: {}]
  %s2 = inlined_call_operand.vmem [shape: s32[8,128], index: 2, kind: input, shape index: {}]
  %s3 = inlined_call_operand.vmem [shape: s32[8,1], index: 3, kind: input, shape index: {}]
  %s4 = inlined_call_operand.vmem [shape: s32[8,1], index: 4, kind: input, shape index: {}]
  %s5 = inlined_call_operand.vmem [shape: f32[8,1], index: 5, kind: output, shape index: {}]
  %s6 = sld [smem:[#allocation0]]
  $region33: #{joint_ctc_ce_loss.2} parent=0
    _
  %s8 = ssub.s32 1, %s6
  %s9 = scalar_select 0, %s8, %s6
  %10 = sst [smem:[#allocation4]] %s0
  // Predicated region
  $region2: #{joint_ctc_ce_loss.2} parent=0 // pred_check
    _
  $region3: #{joint_ctc_ce_loss.2} parent=0 // pred_check_branch
    %12 = sbr.rel (0) target = $region5
  $region4: #{joint_ctc_ce_loss.2} parent=0 // pred_region
    _
  $region5: #{joint_ctc_ce_loss.2} parent=0 // pred_fallthru
    _
  // Predicated region
  $region6: #{joint_ctc_ce_loss.2} parent=0 // pred_check
    _
  $region7: #{joint_ctc_ce_loss.2} parent=0 // pred_check_branch
    %14 = sbr.rel (0) target = $region9
  $region8: #{joint_ctc_ce_loss.2} parent=0 // pred_region
    _
  $region9: #{joint_ctc_ce_loss.2} parent=0 // pred_fallthru
    _
  // Predicated region
  $region10: #{joint_ctc_ce_loss.2} parent=0 // pred_check
    _
  $region11: #{joint_ctc_ce_loss.2} parent=0 // pred_check_branch
    %16 = sbr.rel (0) target = $region13
  $region12: #{joint_ctc_ce_loss.2} parent=0 // pred_region
    _
  $region13: #{joint_ctc_ce_loss.2} parent=0 // pred_fallthru
    _
  // Predicated region
  $region14: #{joint_ctc_ce_loss.2} parent=0 // pred_check
    _
  $region15: #{joint_ctc_ce_loss.2} parent=0 // pred_check_branch
    %18 = sbr.rel (0) target = $region17
  $region16: #{joint_ctc_ce_loss.2} parent=0 // pred_region
    _
  $region17: #{joint_ctc_ce_loss.2} parent=0 // pred_fallthru
    _
  %v20 = vld [vmem:[%s2] sm:$0xff]
  %v21 = vlaneseq
  %v22 = vshrl.u32 %v21, 7
  %v23 = vadd.s32 %v22, 8
  %v24 = vadd.s32 %v22, 16
  %v25 = vadd.s32 %v22, 24
  %s26 = smul.u32 0, 32
  %v27 = vstv %s26
  %v28 = vadd.s32 %v22, %v27
  %v29 = vadd.s32 %v23, %v27
  %v30 = vadd.s32 %v24, %v27
  %v31 = vadd.s32 %v25, %v27
  %v32 = vperm.slane %v20, 0
  %vm33 = vcmp.eq.s32.totalorder %v28, %v32
  %vm34 = vcmp.eq.s32.totalorder %v29, %v32
  %vm35 = vcmp.eq.s32.totalorder %v30, %v32
  %vm36 = vcmp.eq.s32.totalorder %v31, %v32
  %v37 = vsel %vm33, 1, 0
  %v38 = vsel %vm34, 1, 0
  %v39 = vsel %vm35, 1, 0
  %v40 = vsel %vm36, 1, 0
  %v41 = vcvt.s32.f32 %v37
  %v42 = vcvt.s32.f32 %v38
  %v43 = vcvt.s32.f32 %v39
  %v44 = vcvt.s32.f32 %v40
  %v45 = vpack.c.bf16 %v42, %v41
  %v46 = vpack.c.bf16 %v44, %v43
  %v47 = vld [vmem:[%s1] sm:$0xff]
  %v48 = vld [vmem:[%s1 + $0x8] sm:$0xff]
  %v49 = vpack.c.bf16 %v48, %v47
  %vm50 = vcmask 261120
  %v52 = vsel %vm50, %v49, 0
  %54 = vmatpush.bf16.msra.mxu0 0
  %55 = vmatpush.bf16.msra.mxu0 0
  %56 = vmatpush.bf16.msra.mxu0 0
  %57 = vmatpush.bf16.msra.mxu0 0
  %58 = vmatpush.bf16.msra.mxu0 0
  %59 = vmatpush.bf16.msra.mxu0 0
  %60 = vmatpush.bf16.msra.mxu0 %v46
  %61 = vmatpush.bf16.msra.mxu0 %v45
  %62 = vmatmul.bf16.gmra.mxu0 %v52
  %v63 = vpop.f32.mrf.mxu0
  %v64 = vadd.f32 0.0, %v63
  %v65 = vpop.f32.mrf.mxu0
  %v66 = vadd.f32 0.0, %v65
  %67 = vdwg.mxu0
  %68 = vst [vmem:[#allocation2] sm:$0xff] %v64
  %69 = vst [vmem:[#allocation2 + $0x8] sm:$0xff] %v66
  %v70 = vperm.slane %v20, 1
  %vm71 = vcmp.eq.s32.totalorder %v28, %v70
  %vm72 = vcmp.eq.s32.totalorder %v29, %v70
  %vm73 = vcmp.eq.s32.totalorder %v30, %v70
  %vm74 = vcmp.eq.s32.totalorder %v31, %v70
  %v75 = vsel %vm71, 1, 0
  %v76 = vsel %vm72, 1, 0
  %v77 = vsel %vm73, 1, 0
  %v78 = vsel %vm74, 1, 0
  %v79 = vcvt.s32.f32 %v75
  %v80 = vcvt.s32.f32 %v76
  %v81 = vcvt.s32.f32 %v77
  %v82 = vcvt.s32.f32 %v78
  %v83 = vpack.c.bf16 %v80, %v79
  %v84 = vpack.c.bf16 %v82, %v81
  %s85 = scalar_lea.vmem %s1, 16
  %v86 = vld [vmem:[%s85] sm:$0xff]
  %v87 = vld [vmem:[%s85 + $0x8] sm:$0xff]
  %v88 = vpack.c.bf16 %v87, %v86
  %v90 = vsel %vm50, %v88, 0
  %92 = vmatpush.bf16.msra.mxu0 0
  %93 = vmatpush.bf16.msra.mxu0 0
  %94 = vmatpush.bf16.msra.mxu0 0
  %95 = vmatpush.bf16.msra.mxu0 0
  %96 = vmatpush.bf16.msra.mxu0 0
  %97 = vmatpush.bf16.msra.mxu0 0
  %98 = vmatpush.bf16.msra.mxu0 %v84
  %99 = vmatpush.bf16.msra.mxu0 %v83
  %100 = vmatmul.bf16.gmra.mxu0 %v90
  %v101 = vpop.f32.mrf.mxu0
  %v102 = vadd.f32 0.0, %v101
  %v103 = vpop.f32.mrf.mxu0
  %v104 = vadd.f32 0.0, %v103
  %105 = vdwg.mxu0
  %106 = vst [vmem:[#allocation2 + $0x10] sm:$0xff] %v102
  %107 = vst [vmem:[#allocation2 + $0x18] sm:$0xff] %v104
  %v108 = vperm.slane %v20, 2
  %vm109 = vcmp.eq.s32.totalorder %v28, %v108
  %vm110 = vcmp.eq.s32.totalorder %v29, %v108
  %vm111 = vcmp.eq.s32.totalorder %v30, %v108
  %vm112 = vcmp.eq.s32.totalorder %v31, %v108
  %v113 = vsel %vm109, 1, 0
  %v114 = vsel %vm110, 1, 0
  %v115 = vsel %vm111, 1, 0
  %v116 = vsel %vm112, 1, 0
  %v117 = vcvt.s32.f32 %v113
  %v118 = vcvt.s32.f32 %v114
  %v119 = vcvt.s32.f32 %v115
  %v120 = vcvt.s32.f32 %v116
  %v121 = vpack.c.bf16 %v118, %v117
  %v122 = vpack.c.bf16 %v120, %v119
  %s123 = scalar_lea.vmem %s1, 32
  %v124 = vld [vmem:[%s123] sm:$0xff]
  %v125 = vld [vmem:[%s123 + $0x8] sm:$0xff]
  %v126 = vpack.c.bf16 %v125, %v124
  %v128 = vsel %vm50, %v126, 0
  %130 = vmatpush.bf16.msra.mxu0 0
  %131 = vmatpush.bf16.msra.mxu0 0
  %132 = vmatpush.bf16.msra.mxu0 0
  %133 = vmatpush.bf16.msra.mxu0 0
  %134 = vmatpush.bf16.msra.mxu0 0
  %135 = vmatpush.bf16.msra.mxu0 0
  %136 = vmatpush.bf16.msra.mxu0 %v122
  %137 = vmatpush.bf16.msra.mxu0 %v121
  %138 = vmatmul.bf16.gmra.mxu0 %v128
  %v139 = vpop.f32.mrf.mxu0
  %v140 = vadd.f32 0.0, %v139
  %v141 = vpop.f32.mrf.mxu0
  %v142 = vadd.f32 0.0, %v141
  %143 = vdwg.mxu0
  %144 = vst [vmem:[#allocation2 + $0x20] sm:$0xff] %v140
  %145 = vst [vmem:[#allocation2 + $0x28] sm:$0xff] %v142
  %v146 = vperm.slane %v20, 3
  %vm147 = vcmp.eq.s32.totalorder %v28, %v146
  %vm148 = vcmp.eq.s32.totalorder %v29, %v146
  %vm149 = vcmp.eq.s32.totalorder %v30, %v146
  %vm150 = vcmp.eq.s32.totalorder %v31, %v146
  %v151 = vsel %vm147, 1, 0
  %v152 = vsel %vm148, 1, 0
  %v153 = vsel %vm149, 1, 0
  %v154 = vsel %vm150, 1, 0
  %v155 = vcvt.s32.f32 %v151
  %v156 = vcvt.s32.f32 %v152
  %v157 = vcvt.s32.f32 %v153
  %v158 = vcvt.s32.f32 %v154
  %v159 = vpack.c.bf16 %v156, %v155
  %v160 = vpack.c.bf16 %v158, %v157
  %s161 = scalar_lea.vmem %s1, 48
  %v162 = vld [vmem:[%s161] sm:$0xff]
  %v163 = vld [vmem:[%s161 + $0x8] sm:$0xff]
  %v164 = vpack.c.bf16 %v163, %v162
  %v166 = vsel %vm50, %v164, 0
  %168 = vmatpush.bf16.msra.mxu0 0
  %169 = vmatpush.bf16.msra.mxu0 0
  %170 = vmatpush.bf16.msra.mxu0 0
  %171 = vmatpush.bf16.msra.mxu0 0
  %172 = vmatpush.bf16.msra.mxu0 0
  %173 = vmatpush.bf16.msra.mxu0 0
  %174 = vmatpush.bf16.msra.mxu0 %v160
  %175 = vmatpush.bf16.msra.mxu0 %v159
  %176 = vmatmul.bf16.gmra.mxu0 %v166
  %v177 = vpop.f32.mrf.mxu0
  %v178 = vadd.f32 0.0, %v177
  %v179 = vpop.f32.mrf.mxu0
  %v180 = vadd.f32 0.0, %v179
  %181 = vdwg.mxu0
  %182 = vst [vmem:[#allocation2 + $0x30] sm:$0xff] %v178
  %183 = vst [vmem:[#allocation2 + $0x38] sm:$0xff] %v180
  %v184 = vperm.slane %v20, 4
  %vm185 = vcmp.eq.s32.totalorder %v28, %v184
  %vm186 = vcmp.eq.s32.totalorder %v29, %v184
  %vm187 = vcmp.eq.s32.totalorder %v30, %v184
  %vm188 = vcmp.eq.s32.totalorder %v31, %v184
  %v189 = vsel %vm185, 1, 0
  %v190 = vsel %vm186, 1, 0
  %v191 = vsel %vm187, 1, 0
  %v192 = vsel %vm188, 1, 0
  %v193 = vcvt.s32.f32 %v189
  %v194 = vcvt.s32.f32 %v190
  %v195 = vcvt.s32.f32 %v191
  %v196 = vcvt.s32.f32 %v192
  %v197 = vpack.c.bf16 %v194, %v193
  %v198 = vpack.c.bf16 %v196, %v195
  %s199 = scalar_lea.vmem %s1, 64
  %v200 = vld [vmem:[%s199] sm:$0xff]
  %v201 = vld [vmem:[%s199 + $0x8] sm:$0xff]
  %v202 = vpack.c.bf16 %v201, %v200
  %v204 = vsel %vm50, %v202, 0
  %206 = vmatpush.bf16.msra.mxu0 0
  %207 = vmatpush.bf16.msra.mxu0 0
  %208 = vmatpush.bf16.msra.mxu0 0
  %209 = vmatpush.bf16.msra.mxu0 0
  %210 = vmatpush.bf16.msra.mxu0 0
  %211 = vmatpush.bf16.msra.mxu0 0
  %212 = vmatpush.bf16.msra.mxu0 %v198
  %213 = vmatpush.bf16.msra.mxu0 %v197
  %214 = vmatmul.bf16.gmra.mxu0 %v204
  %v215 = vpop.f32.mrf.mxu0
  %v216 = vadd.f32 0.0, %v215
  %v217 = vpop.f32.mrf.mxu0
  %v218 = vadd.f32 0.0, %v217
  %219 = vdwg.mxu0
  %220 = vst [vmem:[#allocation2 + $0x40] sm:$0xff] %v216
  %221 = vst [vmem:[#allocation2 + $0x48] sm:$0xff] %v218
  %v222 = vperm.slane %v20, 5
  %vm223 = vcmp.eq.s32.totalorder %v28, %v222
  %vm224 = vcmp.eq.s32.totalorder %v29, %v222
  %vm225 = vcmp.eq.s32.totalorder %v30, %v222
  %vm226 = vcmp.eq.s32.totalorder %v31, %v222
  %v227 = vsel %vm223, 1, 0
  %v228 = vsel %vm224, 1, 0
  %v229 = vsel %vm225, 1, 0
  %v230 = vsel %vm226, 1, 0
  %v231 = vcvt.s32.f32 %v227
  %v232 = vcvt.s32.f32 %v228
  %v233 = vcvt.s32.f32 %v229
  %v234 = vcvt.s32.f32 %v230
  %v235 = vpack.c.bf16 %v232, %v231
  %v236 = vpack.c.bf16 %v234, %v233
  %s237 = scalar_lea.vmem %s1, 80
  %v238 = vld [vmem:[%s237] sm:$0xff]
  %v239 = vld [vmem:[%s237 + $0x8] sm:$0xff]
  %v240 = vpack.c.bf16 %v239, %v238
  %v242 = vsel %vm50, %v240, 0
  %244 = vmatpush.bf16.msra.mxu0 0
  %245 = vmatpush.bf16.msra.mxu0 0
  %246 = vmatpush.bf16.msra.mxu0 0
  %247 = vmatpush.bf16.msra.mxu0 0
  %248 = vmatpush.bf16.msra.mxu0 0
  %249 = vmatpush.bf16.msra.mxu0 0
  %250 = vmatpush.bf16.msra.mxu0 %v236
  %251 = vmatpush.bf16.msra.mxu0 %v235
  %252 = vmatmul.bf16.gmra.mxu0 %v242
  %v253 = vpop.f32.mrf.mxu0
  %v254 = vadd.f32 0.0, %v253
  %v255 = vpop.f32.mrf.mxu0
  %v256 = vadd.f32 0.0, %v255
  %257 = vdwg.mxu0
  %258 = vst [vmem:[#allocation2 + $0x50] sm:$0xff] %v254
  %259 = vst [vmem:[#allocation2 + $0x58] sm:$0xff] %v256
  %v260 = vperm.slane %v20, 6
  %vm261 = vcmp.eq.s32.totalorder %v28, %v260
  %vm262 = vcmp.eq.s32.totalorder %v29, %v260
  %vm263 = vcmp.eq.s32.totalorder %v30, %v260
  %vm264 = vcmp.eq.s32.totalorder %v31, %v260
  %v265 = vsel %vm261, 1, 0
  %v266 = vsel %vm262, 1, 0
  %v267 = vsel %vm263, 1, 0
  %v268 = vsel %vm264, 1, 0
  %v269 = vcvt.s32.f32 %v265
  %v270 = vcvt.s32.f32 %v266
  %v271 = vcvt.s32.f32 %v267
  %v272 = vcvt.s32.f32 %v268
  %v273 = vpack.c.bf16 %v270, %v269
  %v274 = vpack.c.bf16 %v272, %v271
  %s275 = scalar_lea.vmem %s1, 96
  %v276 = vld [vmem:[%s275] sm:$0xff]
  %v277 = vld [vmem:[%s275 + $0x8] sm:$0xff]
  %v278 = vpack.c.bf16 %v277, %v276
  %v280 = vsel %vm50, %v278, 0
  %282 = vmatpush.bf16.msra.mxu0 0
  %283 = vmatpush.bf16.msra.mxu0 0
  %284 = vmatpush.bf16.msra.mxu0 0
  %285 = vmatpush.bf16.msra.mxu0 0
  %286 = vmatpush.bf16.msra.mxu0 0
  %287 = vmatpush.bf16.msra.mxu0 0
  %288 = vmatpush.bf16.msra.mxu0 %v274
  %289 = vmatpush.bf16.msra.mxu0 %v273
  %290 = vmatmul.bf16.gmra.mxu0 %v280
  %v291 = vpop.f32.mrf.mxu0
  %v292 = vadd.f32 0.0, %v291
  %v293 = vpop.f32.mrf.mxu0
  %v294 = vadd.f32 0.0, %v293
  %295 = vdwg.mxu0
  %296 = vst [vmem:[#allocation2 + $0x60] sm:$0xff] %v292
  %297 = vst [vmem:[#allocation2 + $0x68] sm:$0xff] %v294
  %v298 = vperm.slane %v20, 7
  %vm299 = vcmp.eq.s32.totalorder %v28, %v298
  %vm300 = vcmp.eq.s32.totalorder %v29, %v298
  %vm301 = vcmp.eq.s32.totalorder %v30, %v298
  %vm302 = vcmp.eq.s32.totalorder %v31, %v298
  %v303 = vsel %vm299, 1, 0
  %v304 = vsel %vm300, 1, 0
  %v305 = vsel %vm301, 1, 0
  %v306 = vsel %vm302, 1, 0
  %v307 = vcvt.s32.f32 %v303
  %v308 = vcvt.s32.f32 %v304
  %v309 = vcvt.s32.f32 %v305
  %v310 = vcvt.s32.f32 %v306
  %v311 = vpack.c.bf16 %v308, %v307
  %v312 = vpack.c.bf16 %v310, %v309
  %s313 = scalar_lea.vmem %s1, 112
  %v314 = vld [vmem:[%s313] sm:$0xff]
  %v315 = vld [vmem:[%s313 + $0x8] sm:$0xff]
  %v316 = vpack.c.bf16 %v315, %v314
  %v318 = vsel %vm50, %v316, 0
  %320 = vmatpush.bf16.msra.mxu0 0
  %321 = vmatpush.bf16.msra.mxu0 0
  %322 = vmatpush.bf16.msra.mxu0 0
  %323 = vmatpush.bf16.msra.mxu0 0
  %324 = vmatpush.bf16.msra.mxu0 0
  %325 = vmatpush.bf16.msra.mxu0 0
  %326 = vmatpush.bf16.msra.mxu0 %v312
  %327 = vmatpush.bf16.msra.mxu0 %v311
  %328 = vmatmul.bf16.gmra.mxu0 %v318
  %v329 = vpop.f32.mrf.mxu0
  %v330 = vadd.f32 0.0, %v329
  %v331 = vpop.f32.mrf.mxu0
  %v332 = vadd.f32 0.0, %v331
  %333 = vdwg.mxu0
  %334 = vst [vmem:[#allocation2 + $0x70] sm:$0xff] %v330
  %335 = vst [vmem:[#allocation2 + $0x78] sm:$0xff] %v332
  %v336 = vlaneseq
  %v337 = vand.u32 %v336, 127
  %vm338 = vcmp.ge.s32.totalorder %v337, 2
  %339 = vrot.lane.b32.xlu0 %v20, 2
  %v340 = vpop.permute.xlu0 %339
  %v341 = vsel %vm338, %v340, 4294967295
  %v342 = vand.u32 %v337, 1
  %vm343 = vcmp.eq.s32.totalorder %v342, 1
  %vm344 = vmand %vm343, %vm338
  %vm345 = vcmp.ne.s32.totalorder %v20, %v341
  %vm346 = vmand %vm344, %vm345
  %v347 = vld [vmem:[%s3] sm:$0xff]
  %v348 = vld [vmem:[%s4] sm:$0xff]
  %vm349 = vcmp.lt.s32.totalorder %v337, 2
  %v350 = vld [vmem:[#allocation2] sm:$0x1]
  %v351 = vld [vmem:[#allocation2 + $0x10] sm:$0x1]
  %v352 = vld [vmem:[#allocation2 + $0x20] sm:$0x1]
  %v353 = vld [vmem:[#allocation2 + $0x30] sm:$0x1]
  %v354 = vld [vmem:[#allocation2 + $0x40] sm:$0x1]
  %v355 = vld [vmem:[#allocation2 + $0x50] sm:$0x1]
  %v356 = vld [vmem:[#allocation2 + $0x60] sm:$0x1]
  %v357 = vld [vmem:[#allocation2 + $0x70] sm:$0x1]
  %v359 = vrot.slane %v351, 7
  %v362 = vrot.slane %v352, 6
  %v365 = vrot.slane %v353, 5
  %v368 = vrot.slane %v354, 4
  %v371 = vrot.slane %v355, 3
  %v374 = vrot.slane %v356, 2
  %v377 = vrot.slane %v357, 1
  %vm379 = vcmask 1040384
  %v380 = vsel %vm379, %v350, %v359
  %vm381 = vcmask 1041408
  %v382 = vsel %vm381, %v380, %v362
  %vm383 = vcmask 1042432
  %v384 = vsel %vm383, %v382, %v365
  %vm385 = vcmask 1043456
  %v386 = vsel %vm385, %v384, %v368
  %vm387 = vcmask 1044480
  %v388 = vsel %vm387, %v386, %v371
  %vm389 = vcmask 1045504
  %v390 = vsel %vm389, %v388, %v374
  %vm391 = vcmask 1046528
  %v392 = vsel %vm391, %v390, %v377
  %v393 = vsel %vm349, %v392, -1e+30
  %s394 = sld [smem:[#allocation4]]
  // While loop
  $region18: #{joint_ctc_ce_loss.2} parent=0 // loop_pre_header
    _
  $region19: #{joint_ctc_ce_loss.2} parent=0 // loop_header
    %s396 = sphi 1, %s398
    %p397 = scmp.ge.s32.totalorder %s396, %s394
    %v401 = vphi %v393, %v484
  $region20: #{joint_ctc_ce_loss.2} parent=0 // loop_header_branch
    %400 = sbr.rel (%p397) target = $region24
  $region21: #{joint_ctc_ce_loss.2} parent=0 // loop_body
    %vm402 = vcmp.ge.s32.totalorder %v337, 1
    %403 = vrot.lane.b32.xlu0 %v401, 1
    %v404 = vpop.permute.xlu0 %403
    %v405 = vsel %vm402, %v404, -1e+30
    %406 = vrot.lane.b32.xlu0 %v401, 2
    %v407 = vpop.permute.xlu0 %406
    %v408 = vsel %vm346, %v407, -1e+30
    %v409 = vmax.f32 %v405, %v408
    %v410 = vmax.f32 %v401, %v409
    %v411 = vsub.f32 %v401, %v410
    %v412 = vmul.f32 %v411, 1.442695
    %v413 = vpow.pop %v412
    %v414 = vsub.f32 %v405, %v410
    %v415 = vmul.f32 %v414, 1.442695
    %v416 = vpow.pop %v415
    %v417 = vadd.f32 %v413, %v416
    %v418 = vsub.f32 %v408, %v410
    %v419 = vmul.f32 %v418, 1.442695
    %v420 = vpow.pop %v419
    %v421 = vadd.f32 %v417, %v420
    %v422 = vlog2.pop %v421
    %v423 = vmul.f32 %v422, 0.6931472
    %v424 = vadd.f32 %v410, %v423
    %s425 = scalar_lea.vmem [#allocation2], %s396
    %v426 = vld [vmem:[%s425] sm:$0x1]
    %s427 = sadd.s32 %s396, 16
    %s428 = scalar_lea.vmem [#allocation2], %s427
    %v429 = vld [vmem:[%s428] sm:$0x1]
    %s430 = sadd.s32 %s396, 32
    %s431 = scalar_lea.vmem [#allocation2], %s430
    %v432 = vld [vmem:[%s431] sm:$0x1]
    %s433 = sadd.s32 %s396, 48
    %s434 = scalar_lea.vmem [#allocation2], %s433
    %v435 = vld [vmem:[%s434] sm:$0x1]
    %s436 = sadd.s32 %s396, 64
    %s437 = scalar_lea.vmem [#allocation2], %s436
    %v438 = vld [vmem:[%s437] sm:$0x1]
    %s439 = sadd.s32 %s396, 80
    %s440 = scalar_lea.vmem [#allocation2], %s439
    %v441 = vld [vmem:[%s440] sm:$0x1]
    %s442 = sadd.s32 %s396, 96
    %s443 = scalar_lea.vmem [#allocation2], %s442
    %v444 = vld [vmem:[%s443] sm:$0x1]
    %s445 = sadd.s32 %s396, 112
    %s446 = scalar_lea.vmem [#allocation2], %s445
    %v447 = vld [vmem:[%s446] sm:$0x1]
    %v449 = vrot.slane %v429, 7
    %v452 = vrot.slane %v432, 6
    %v455 = vrot.slane %v435, 5
    %v458 = vrot.slane %v438, 4
    %v461 = vrot.slane %v441, 3
    %v464 = vrot.slane %v444, 2
    %v467 = vrot.slane %v447, 1
    %v469 = vsel %vm379, %v426, %v449
    %v470 = vsel %vm381, %v469, %v452
    %v471 = vsel %vm383, %v470, %v455
    %v472 = vsel %vm385, %v471, %v458
    %v473 = vsel %vm387, %v472, %v461
    %v474 = vsel %vm389, %v473, %v464
    %v475 = vsel %vm391, %v474, %v467
    %v476 = vadd.f32 %v475, %v424
    %v477 = vstv %s396
    %vm478 = vcmp.lt.s32.totalorder %v477, %v347
    %v479 = vsel %vm478, 1, 0
    %480 = vset.pattern.permute.xlu0 0
    %481 = vperm.xlu0 %480, %v479
    %v482 = vpop.permute.xlu0 %481
    %vm483 = vcmp.eq.s32.totalorder %v482, 1
    %v484 = vsel %vm483, %v476, %v401
  $region22: #{joint_ctc_ce_loss.2} parent=0 // loop_footer
    %s398 = sadd.s32 %s396, 1
  $region23: #{joint_ctc_ce_loss.2} parent=0 // loop_footer_branch
    %395 = sbr.rel target = $region19
  $region24: #{joint_ctc_ce_loss.2} parent=0 // loop_exit
    _
  %v485 = vmul.u32 %v348, 2
  %486 = vset.pattern.permute.xlu0 0
  %487 = vperm.xlu0 %486, %v485
  %v488 = vpop.permute.xlu0 %487
  %vm489 = vcmp.eq.s32.totalorder %v337, %v488
  %v490 = vsub.s32 %v485, 1
  %491 = vset.pattern.permute.xlu0 0
  %492 = vperm.xlu0 %491, %v490
  %v493 = vpop.permute.xlu0 %492
  %vm494 = vcmp.eq.s32.totalorder %v337, %v493
  %vm495 = vmor %vm489, %vm494
  %v496 = vsel %vm495, %v401, -1e+30
  %497 = vmax.xlane.f32.xlu0 %v496
  %v498 = vpop.xlane.xlu0 %497
  %v499 = vsub.f32 %v496, %v498
  %v500 = vmul.f32 %v499, 1.442695
  %v501 = vpow.pop %v500
  %502 = vadd.xlane.f32.xlu0 %v501
  %v503 = vpop.xlane.xlu0 %502
  %v504 = vlog2.pop %v503
  %v505 = vmul.f32 %v504, 0.6931472
  %v506 = vadd.f32 %v498, %v505
  %v507 = vsub.f32 0.0, %v506
  %vm508 = vcmp.lt.f32.partialorder %v498, -1e+29
  %v509 = vsel %vm508, 0.0, %v507
  %vm510 = vcmp.gt.s32.totalorder %v348, 1
  %v511 = vsel %vm510, %v348, 1
  %v512 = vcvt.s32.f32 %v511
  %v513 = vrcp.pop %v512
  %v514 = vmul.f32 %v512, %v513
  %v515 = vsub.f32 1.0, %v514
  %v516 = vmul.f32 %v513, %v515
  %v517 = vadd.f32 %v513, %v516
  %vm518 = vweird.f32 %v512
  %vm519 = vweird.f32 %v513
  %vm520 = vmor %vm518, %vm519
  %v521 = vsel %vm520, %v513, %v517
  %v522 = vand.u32 2147483647, %v512
  %vm523 = vcmp.eq.f32.partialorder %v522, 8.507059e+37
  %v524 = vand.u32 %v512, 2147483648
  %v525 = vor.u32 1.1754944e-38, %v524
  %v526 = vsel %vm523, %v525, %v521
  %v527 = vmul.f32 %v509, %v526
  %vm528 = vcmask 7168
  %529 = vst.msk [vmem:[%s5] sm:$0xff] %vm528, %v527
  // Predicated region
  $region25: #{joint_ctc_ce_loss.2} parent=0 // pred_check
    _
  $region26: #{joint_ctc_ce_loss.2} parent=0 // pred_check_branch
    %531 = sbr.rel (0) target = $region28
  $region27: #{joint_ctc_ce_loss.2} parent=0 // pred_region
    _
  $region28: #{joint_ctc_ce_loss.2} parent=0 // pred_fallthru
    _
  // Predicated region
  $region29: #{joint_ctc_ce_loss.2} parent=0 // pred_check
    _
  $region30: #{joint_ctc_ce_loss.2} parent=0 // pred_check_branch
    %533 = sbr.rel (0) target = $region32
  $region31: #{joint_ctc_ce_loss.2} parent=0 // pred_region
    _
  $region32: #{joint_ctc_ce_loss.2} parent=0 // pred_fallthru
    _

</llo_original>
